<compile_context>
chip_gen: v7x
topology: tpu7x:2x2x1
jax: 0.10.0
libtpu: 0.0.40
codegen_flags: <defaults>
</compile_context>

<pallas_src>
import jax
import jax.numpy as jnp
from jax.experimental import pallas as pl
from jax.experimental.pallas import tpu as pltpu

_LANE = 128
_SUBLANE = 8


def _round_up(n, m):
    return ((n + m - 1) // m) * m


def _sigmoid(x):
    # Single-EUP sigmoid (one tanh) instead of exp + divide on the serial path.
    return 0.5 * (jnp.tanh(0.5 * x) + 1.0)


def _make_encoder_kernel(Tc, Bp, H, Hh, G, compact):
    """GRU time-chunk + Linear kernel for static (Tc, Bp, H, Hh, G)."""

    def kernel(x_ref, wih_ref, whh_ref, bgi_ref, bhhn_ref, wlin_ref, blin_ref,
               out_ref, gi_ref, hs_ref, h_ref):
        # h_ref persists across grid steps (time chunks); zero it once.
        @pl.when(pl.program_id(0) == 0)
        def _():
            h_ref[...] = jnp.zeros_like(h_ref)

        # ---- Prologue (off the serial path): input projection for the whole
        # chunk as one MXU matmul.  b_ih (all gates) and b_hh (r,z gates) are
        # already folded into bgi, so no r/z bias add remains in the loop. ----
        gi_ref[...] = (
            jnp.dot(x_ref[...], wih_ref[...],
                    preferred_element_type=jnp.float32)
            + bgi_ref[...]
        )

        whh = whh_ref[...]
        wdt = whh.dtype
        bhhn = bhhn_ref[...]          # (Bp, G): n-gate b_hh, pre-broadcast

        # ---- Serial recurrence: only h @ W_hh (+ cheap VPU/EUP/XLU work)
        # stays on the critical path.  fori_loop keeps h in vregs as the carry.
        # TODO(synk): hold W_hh resident in MXU weight registers across the
        # loop (pltpu.matmul_push_rhs / matmul_acc_lhs / matmul_pop) once the
        # weights are bf16 -- removes the per-step RHS push for tiny B.
        def step(t, h):
            r0 = pl.multiple_of(t * Bp, Bp)            # Bp is a multiple of 8
            gi = gi_ref[pl.ds(r0, Bp), :]              # (Bp, G)
            gh = jnp.dot(h.astype(wdt), whh,
                         preferred_element_type=jnp.float32) + bhhn
            if compact:
                # All three gates in one 128-lane block:
                #   r @ [0,H), z @ [H,2H), n @ [2H,3H).
                s = _sigmoid(gi + gh)
                r_n = pltpu.roll(s, 2 * H, axis=1)          # r -> n lanes
                tblk = jnp.tanh(gi + r_n * gh)              # n valid @ [2H,3H)
                n0 = pltpu.roll(tblk, G - 2 * H, axis=1)    # n -> lanes [0,H)
                z0 = pltpu.roll(s, G - H, axis=1)           # z -> lanes [0,H)
                # Lanes >= H accumulate bounded garbage; the zero-padded
                # W_hh / W_lin rows ignore it, so real lanes stay exact.
                h = (1.0 - z0) * n0 + z0 * h
            else:
                # One lane-padded 128*k block per gate: full-vreg slices.
                i_r, i_z, i_n = gi[:, :Hh], gi[:, Hh:2 * Hh], gi[:, 2 * Hh:]
                h_r, h_z, h_n = gh[:, :Hh], gh[:, Hh:2 * Hh], gh[:, 2 * Hh:]
                r = _sigmoid(i_r + h_r)
                z = _sigmoid(i_z + h_z)
                n = jnp.tanh(i_n + r * h_n)
                h = (1.0 - z) * n + z * h
            hs_ref[pl.ds(r0, Bp), :] = h
            return h

        h_last = jax.lax.fori_loop(0, Tc, step, h_ref[...], unroll=True)
        h_ref[...] = h_last           # carry the hidden state into next chunk

        # ---- Epilogue: output Linear for the whole chunk in one matmul,
        # single lane-dense store. ----
        out_ref[...] = (
            jnp.dot(hs_ref[...].astype(wdt), wlin_ref[...],
                    preferred_element_type=jnp.float32)
            + blin_ref[...]
        ).astype(out_ref.dtype)

    return kernel


def encoder_forward(inp, params, *, time_chunk=16, weight_dtype=jnp.float32):
    """inp: (T, B, I) float32, seq-major like nn.GRU. Returns (T, B, O)."""
    T, B, I = inp.shape
    H = params["w_hh"].shape[1]
    O = params["w_lin"].shape[0]
    f32 = jnp.float32

    compact = (3 * H) <= _LANE
    if compact:
        # Small H: all three gates packed compactly into a single lane block.
        Hh, G = _LANE, _LANE
        offs = (0, H, 2 * H)
    else:
        # Large H: one lane-padded block per gate -> full-vreg gate slices.
        Hh = _round_up(H, _LANE)
        G = 3 * Hh
        offs = (0, Hh, 2 * Hh)
    Op = _round_up(O, _LANE)
    Bp = _round_up(B, _SUBLANE)          # f32 sublane alignment for row slices
    Tc = max(1, min(time_chunk, T))
    n_chunks = pl.cdiv(T, Tc)
    Tp = n_chunks * Tc

    # ---- Parameter repacking (gate-blocked, lane-padded, zero padding). ----
    def pack_gate_weight(w, rows):               # w: (3H, in_dim) torch layout
        in_dim = w.shape[1]
        packed = jnp.zeros((rows, G), f32)
        for g in range(3):
            packed = packed.at[:in_dim, offs[g]:offs[g] + H].set(
                w[g * H:(g + 1) * H, :].T.astype(f32))
        return packed.astype(weight_dtype)

    wih_p = pack_gate_weight(params["w_ih"], I)   # (I, G)
    whh_p = pack_gate_weight(params["w_hh"], Hh)  # (Hh, G); rows >= H are zero

    # b_ih (all gates) + b_hh (r,z gates) folded into the prologue bias; only
    # the n-gate b_hh stays with the recurrence (inside r * (...)).
    bgi_p = jnp.zeros((1, G), f32)
    for g in range(3):
        bgi_p = bgi_p.at[0, offs[g]:offs[g] + H].add(
            params["b_ih"][g * H:(g + 1) * H].astype(f32))
    for g in range(2):                            # r and z gates only
        bgi_p = bgi_p.at[0, offs[g]:offs[g] + H].add(
            params["b_hh"][g * H:(g + 1) * H].astype(f32))
    bhhn = jnp.zeros((1, G), f32).at[0, offs[2]:offs[2] + H].set(
        params["b_hh"][2 * H:3 * H].astype(f32))
    bhhn_p = jnp.broadcast_to(bhhn, (Bp, G))      # hoisted (B, G) broadcast

    wlin_p = jnp.zeros((Hh, Op), f32).at[:H, :O].set(
        params["w_lin"].T.astype(f32)).astype(weight_dtype)
    blin_p = jnp.zeros((1, Op), f32).at[0, :O].set(params["b_lin"].astype(f32))

    # ---- Input: pad time to a multiple of Tc, batch to a multiple of 8.
    # Padded timesteps sit after the real ones (causal recurrence -> no
    # contamination); padded batch rows are independent and sliced away. ----
    x = inp.astype(f32)
    if Tp != T or Bp != B:
        x = jnp.zeros((Tp, Bp, I), f32).at[:T, :B, :].set(x)
    x2d = x.reshape(Tp * Bp, I).astype(weight_dtype)

    def full_spec(arr):
        nd = arr.ndim
        return pl.BlockSpec(arr.shape, lambda c, _nd=nd: (0,) * _nd)
    # TODO(synk): at large H use pipeline_mode=pl.Buffered(1) for the weight
    # specs (they are never re-streamed, so double buffering is pure waste).

    out2d = pl.pallas_call(
        _make_encoder_kernel(Tc, Bp, H, Hh, G, compact),
        out_shape=jax.ShapeDtypeStruct((Tp * Bp, Op), inp.dtype),
        grid_spec=pltpu.PrefetchScalarGridSpec(
            num_scalar_prefetch=0,
            grid=(n_chunks,),
            in_specs=[
                pl.BlockSpec((Tc * Bp, I), lambda c: (c, 0)),   # x per chunk
                full_spec(wih_p), full_spec(whh_p), full_spec(bgi_p),
                full_spec(bhhn_p), full_spec(wlin_p), full_spec(blin_p),
            ],
            out_specs=pl.BlockSpec((Tc * Bp, Op), lambda c: (c, 0)),
            scratch_shapes=[
                pltpu.VMEM((Tc * Bp, G), jnp.float32),    # gi for one chunk
                pltpu.VMEM((Tc * Bp, Hh), jnp.float32),   # h_t for one chunk
                pltpu.VMEM((Bp, Hh), jnp.float32),        # h carried over chunks
            ],
        ),
        # Time chunks are sequential (h carry) -> "arbitrary".
        # TODO(synk): for large B on v7x add a leading "parallel" batch-chunk
        # grid axis so both TensorCores run independent batch slices.
        compiler_params=pltpu.CompilerParams(
            dimension_semantics=("arbitrary",),
        ),
    )(x2d, wih_p, whh_p, bgi_p, bhhn_p, wlin_p, blin_p)

    # Lane-dense (Op) store happens in-kernel; the narrow O slice is taken here.
    # TODO(synk): at large T*B fuse this slice into the downstream consumer
    # instead of materializing the padded intermediate.
    return out2d.reshape(Tp, Bp, Op)[:T, :B, :O]


def _reference_forward(inp, params):
    """Pure-JAX GRU + Linear reference (matches PyTorch semantics)."""
    H = params["w_hh"].shape[1]

    def step(h, x):
        gi = x @ params["w_ih"].T + params["b_ih"]
        gh = h @ params["w_hh"].T + params["b_hh"]
        i_r, i_z, i_n = gi[:, :H], gi[:, H:2 * H], gi[:, 2 * H:]
        h_r, h_z, h_n = gh[:, :H], gh[:, H:2 * H], gh[:, 2 * H:]
        r = jax.nn.sigmoid(i_r + h_r)
        z = jax.nn.sigmoid(i_z + h_z)
        n = jnp.tanh(i_n + r * h_n)
        h_new = (1.0 - z) * n + z * h
        return h_new, h_new

    h0 = jnp.zeros((inp.shape[1], H), jnp.float32)
    _, hs = jax.lax.scan(step, h0, inp)
    return hs @ params["w_lin"].T + params["b_lin"]


def init_params(key, input_size, hidden_size, output_size):
    ks = jax.random.split(key, 6)
    k_gru = 1.0 / jnp.sqrt(hidden_size)   # PyTorch GRU init U(-1/sqrt(H), 1/sqrt(H))
    k_lin = 1.0 / jnp.sqrt(hidden_size)   # Linear init bound
    u = lambda k, shape, b: jax.random.uniform(k, shape, jnp.float32, -b, b)
    return {
        "w_ih": u(ks[0], (3 * hidden_size, input_size), k_gru),
        "w_hh": u(ks[1], (3 * hidden_size, hidden_size), k_gru),
        "b_ih": u(ks[2], (3 * hidden_size,), k_gru),
        "b_hh": u(ks[3], (3 * hidden_size,), k_gru),
        "w_lin": u(ks[4], (output_size, hidden_size), k_lin),
        "b_lin": u(ks[5], (output_size,), k_lin),
    }


if __name__ == "__main__":
    T, B = 8, 8
    input_size, hidden_size, output_size = 4, 32, 16

    key = jax.random.PRNGKey(0)
    k_params, k_inp = jax.random.split(key)
    params = init_params(k_params, input_size, hidden_size, output_size)
    inp = jax.random.normal(k_inp, (T, B, input_size), jnp.float32)

    ref = _reference_forward(inp, params)

    # Single time chunk (compact gate packing, whole recurrence in one call).
    out = jax.block_until_ready(encoder_forward(inp, params))
    assert out.shape == (T, B, output_size)
    assert jnp.allclose(out, ref, atol=1e-4, rtol=1e-4), "mismatch (1 chunk)"

    # Multi-chunk path: h carried across grid steps in persistent VMEM scratch.
    out_c = jax.block_until_ready(encoder_forward(inp, params, time_chunk=4))
    assert jnp.allclose(out_c, ref, atol=1e-4, rtol=1e-4), "mismatch (chunked)"

    print("KERNEL_OK")
</pallas_src>

<mosaic_0001>
module attributes {stable_mosaic.version = 11 : i64} {
  func.func @kernel(%arg0: i32, %arg1: memref<64x4xf32, #tpu.memory_space<vmem>>, %arg2: memref<4x128xf32, #tpu.memory_space<vmem>>, %arg3: memref<128x128xf32, #tpu.memory_space<vmem>>, %arg4: memref<1x128xf32, #tpu.memory_space<vmem>>, %arg5: memref<8x128xf32, #tpu.memory_space<vmem>>, %arg6: memref<128x128xf32, #tpu.memory_space<vmem>>, %arg7: memref<1x128xf32, #tpu.memory_space<vmem>>, %arg8: memref<64x128xf32, #tpu.memory_space<vmem>>, %arg9: memref<64x128xf32, #tpu.memory_space<vmem>>, %arg10: memref<64x128xf32, #tpu.memory_space<vmem>>, %arg11: memref<8x128xf32, #tpu.memory_space<vmem>>) attributes {dimension_semantics = [#tpu.dimension_semantics<arbitrary>], iteration_bounds = array<i64: 1>, scalar_prefetch = 0 : i64, scratch_operands = 3 : i64, tpu.core_type = #tpu.core_type<tc>, window_params = [{transform_indices = @transform_0, window_bounds = array<i64: 64, 4>}, {pipeline_mode = #tpu.pipeline_mode<synchronous>, transform_indices = @transform_1, window_bounds = array<i64: 4, 128>}, {pipeline_mode = #tpu.pipeline_mode<synchronous>, transform_indices = @transform_2, window_bounds = array<i64: 128, 128>}, {pipeline_mode = #tpu.pipeline_mode<synchronous>, transform_indices = @transform_3, window_bounds = array<i64: 1, 128>}, {pipeline_mode = #tpu.pipeline_mode<synchronous>, transform_indices = @transform_4, window_bounds = array<i64: 8, 128>}, {pipeline_mode = #tpu.pipeline_mode<synchronous>, transform_indices = @transform_5, window_bounds = array<i64: 128, 128>}, {pipeline_mode = #tpu.pipeline_mode<synchronous>, transform_indices = @transform_6, window_bounds = array<i64: 1, 128>}, {transform_indices = @transform_7, window_bounds = array<i64: 64, 128>}]} {
    %c0_i32 = arith.constant 0 : i32
    %0 = arith.cmpi eq, %arg0, %c0_i32 : i32
    %1 = arith.extui %0 : i1 to i32
    %c0_i32_0 = arith.constant 0 : i32
    %2 = arith.cmpi ne, %1, %c0_i32_0 : i32
    scf.if %2 {
      %cst_112 = arith.constant 0.000000e+00 : f32
      %237 = vector.broadcast %cst_112 : f32 to vector<8x128xf32>
      %c0_113 = arith.constant 0 : index
      %c0_114 = arith.constant 0 : index
      %238 = vector.load %arg11[%c0_113, %c0_114] : memref<8x128xf32, #tpu.memory_space<vmem>>, vector<8x128xf32>
      tpu.vector_store %arg11[%c0_113, %c0_114], %237 {strides = array<i32>} : memref<8x128xf32, #tpu.memory_space<vmem>>, vector<8x128xf32>,
    } else {
    }
    %c0 = arith.constant 0 : index
    %c0_1 = arith.constant 0 : index
    %3 = vector.load %arg1[%c0, %c0_1] : memref<64x4xf32, #tpu.memory_space<vmem>>, vector<64x4xf32>
    %c0_2 = arith.constant 0 : index
    %c0_3 = arith.constant 0 : index
    %4 = vector.load %arg2[%c0_2, %c0_3] : memref<4x128xf32, #tpu.memory_space<vmem>>, vector<4x128xf32>
    %cst = arith.constant dense<0.000000e+00> : vector<64x128xf32>
    %5 = tpu.matmul %3, %4, %cst {dimension_numbers = #tpu.dot_dimension_numbers<[1], [0], [0], [1], [0, 0, 1, 1], [], []>} : vector<64x4xf32>, vector<4x128xf32>, vector<64x128xf32> -> vector<64x128xf32>
    %c0_4 = arith.constant 0 : index
    %c0_5 = arith.constant 0 : index
    %6 = vector.load %arg4[%c0_4, %c0_5] : memref<1x128xf32, #tpu.memory_space<vmem>>, vector<1x128xf32>
    %7 = vector.broadcast %6 : vector<1x128xf32> to vector<64x128xf32>
    %8 = arith.addf %5, %7 : vector<64x128xf32>
    %c0_6 = arith.constant 0 : index
    %c0_7 = arith.constant 0 : index
    %9 = vector.load %arg9[%c0_6, %c0_7] : memref<64x128xf32, #tpu.memory_space<vmem>>, vector<64x128xf32>
    tpu.vector_store %arg9[%c0_6, %c0_7], %8 {strides = array<i32>} : memref<64x128xf32, #tpu.memory_space<vmem>>, vector<64x128xf32>,
    %c0_8 = arith.constant 0 : index
    %c0_9 = arith.constant 0 : index
    %10 = vector.load %arg3[%c0_8, %c0_9] : memref<128x128xf32, #tpu.memory_space<vmem>>, vector<128x128xf32>
    %c0_10 = arith.constant 0 : index
    %c0_11 = arith.constant 0 : index
    %11 = vector.load %arg5[%c0_10, %c0_11] : memref<8x128xf32, #tpu.memory_space<vmem>>, vector<8x128xf32>
    %c0_12 = arith.constant 0 : index
    %c0_13 = arith.constant 0 : index
    %12 = vector.load %arg11[%c0_12, %c0_13] : memref<8x128xf32, #tpu.memory_space<vmem>>, vector<8x128xf32>
    %c0_i32_14 = arith.constant 0 : i32
    %c8_i32 = arith.constant 8 : i32
    %13 = arith.muli %c0_i32_14, %c8_i32 : i32
    %14 = tpu.assume_multiple %13, 8 : i32
    %15 = arith.index_cast %14 : i32 to index
    %c0_15 = arith.constant 0 : index
    %16 = vector.load %arg9[%15, %c0_15] : memref<64x128xf32, #tpu.memory_space<vmem>>, vector<8x128xf32>
    %cst_16 = arith.constant dense<0.000000e+00> : vector<8x128xf32>
    %17 = tpu.matmul %12, %10, %cst_16 {dimension_numbers = #tpu.dot_dimension_numbers<[1], [0], [0], [1], [0, 0, 1, 1], [], []>} : vector<8x128xf32>, vector<128x128xf32>, vector<8x128xf32> -> vector<8x128xf32>
    %18 = arith.addf %17, %11 : vector<8x128xf32>
    %19 = arith.addf %16, %18 : vector<8x128xf32>
    %cst_17 = arith.constant 5.000000e-01 : f32
    %20 = vector.broadcast %cst_17 : f32 to vector<8x128xf32>
    %21 = arith.mulf %20, %19 : vector<8x128xf32>
    %22 = math.tanh %21 : vector<8x128xf32>
    %cst_18 = arith.constant 1.000000e+00 : f32
    %23 = vector.broadcast %cst_18 : f32 to vector<8x128xf32>
    %24 = arith.addf %22, %23 : vector<8x128xf32>
    %cst_19 = arith.constant 5.000000e-01 : f32
    %25 = vector.broadcast %cst_19 : f32 to vector<8x128xf32>
    %26 = arith.mulf %25, %24 : vector<8x128xf32>
    %c64_i32 = arith.constant 64 : i32
    %27 = tpu.dynamic_rotate %26 by %c64_i32 dim 1 : vector<8x128xf32>, i32 -> vector<8x128xf32>
    %28 = arith.mulf %27, %18 : vector<8x128xf32>
    %29 = arith.addf %16, %28 : vector<8x128xf32>
    %30 = math.tanh %29 : vector<8x128xf32>
    %c64_i32_20 = arith.constant 64 : i32
    %31 = tpu.dynamic_rotate %30 by %c64_i32_20 dim 1 : vector<8x128xf32>, i32 -> vector<8x128xf32>
    %c96_i32 = arith.constant 96 : i32
    %32 = tpu.dynamic_rotate %26 by %c96_i32 dim 1 : vector<8x128xf32>, i32 -> vector<8x128xf32>
    %cst_21 = arith.constant 1.000000e+00 : f32
    %33 = vector.broadcast %cst_21 : f32 to vector<8x128xf32>
    %34 = arith.subf %33, %32 : vector<8x128xf32>
    %35 = arith.mulf %34, %31 : vector<8x128xf32>
    %36 = arith.mulf %32, %12 : vector<8x128xf32>
    %37 = arith.addf %35, %36 : vector<8x128xf32>
    %38 = arith.index_cast %14 : i32 to index
    %c0_22 = arith.constant 0 : index
    %39 = vector.load %arg10[%38, %c0_22] : memref<64x128xf32, #tpu.memory_space<vmem>>, vector<8x128xf32>
    tpu.vector_store %arg10[%38, %c0_22], %37 {strides = array<i32>} : memref<64x128xf32, #tpu.memory_space<vmem>>, vector<8x128xf32>,
    %c1_i32 = arith.constant 1 : i32
    %c8_i32_23 = arith.constant 8 : i32
    %40 = arith.muli %c1_i32, %c8_i32_23 : i32
    %41 = tpu.assume_multiple %40, 8 : i32
    %42 = arith.index_cast %41 : i32 to index
    %c0_24 = arith.constant 0 : index
    %43 = vector.load %arg9[%42, %c0_24] : memref<64x128xf32, #tpu.memory_space<vmem>>, vector<8x128xf32>
    %cst_25 = arith.constant dense<0.000000e+00> : vector<8x128xf32>
    %44 = tpu.matmul %37, %10, %cst_25 {dimension_numbers = #tpu.dot_dimension_numbers<[1], [0], [0], [1], [0, 0, 1, 1], [], []>} : vector<8x128xf32>, vector<128x128xf32>, vector<8x128xf32> -> vector<8x128xf32>
    %45 = arith.addf %44, %11 : vector<8x128xf32>
    %46 = arith.addf %43, %45 : vector<8x128xf32>
    %cst_26 = arith.constant 5.000000e-01 : f32
    %47 = vector.broadcast %cst_26 : f32 to vector<8x128xf32>
    %48 = arith.mulf %47, %46 : vector<8x128xf32>
    %49 = math.tanh %48 : vector<8x128xf32>
    %cst_27 = arith.constant 1.000000e+00 : f32
    %50 = vector.broadcast %cst_27 : f32 to vector<8x128xf32>
    %51 = arith.addf %49, %50 : vector<8x128xf32>
    %cst_28 = arith.constant 5.000000e-01 : f32
    %52 = vector.broadcast %cst_28 : f32 to vector<8x128xf32>
    %53 = arith.mulf %52, %51 : vector<8x128xf32>
    %c64_i32_29 = arith.constant 64 : i32
    %54 = tpu.dynamic_rotate %53 by %c64_i32_29 dim 1 : vector<8x128xf32>, i32 -> vector<8x128xf32>
    %55 = arith.mulf %54, %45 : vector<8x128xf32>
    %56 = arith.addf %43, %55 : vector<8x128xf32>
    %57 = math.tanh %56 : vector<8x128xf32>
    %c64_i32_30 = arith.constant 64 : i32
    %58 = tpu.dynamic_rotate %57 by %c64_i32_30 dim 1 : vector<8x128xf32>, i32 -> vector<8x128xf32>
    %c96_i32_31 = arith.constant 96 : i32
    %59 = tpu.dynamic_rotate %53 by %c96_i32_31 dim 1 : vector<8x128xf32>, i32 -> vector<8x128xf32>
    %cst_32 = arith.constant 1.000000e+00 : f32
    %60 = vector.broadcast %cst_32 : f32 to vector<8x128xf32>
    %61 = arith.subf %60, %59 : vector<8x128xf32>
    %62 = arith.mulf %61, %58 : vector<8x128xf32>
    %63 = arith.mulf %59, %37 : vector<8x128xf32>
    %64 = arith.addf %62, %63 : vector<8x128xf32>
    %65 = arith.index_cast %41 : i32 to index
    %c0_33 = arith.constant 0 : index
    %66 = vector.load %arg10[%65, %c0_33] : memref<64x128xf32, #tpu.memory_space<vmem>>, vector<8x128xf32>
    tpu.vector_store %arg10[%65, %c0_33], %64 {strides = array<i32>} : memref<64x128xf32, #tpu.memory_space<vmem>>, vector<8x128xf32>,
    %c2_i32 = arith.constant 2 : i32
    %c8_i32_34 = arith.constant 8 : i32
    %67 = arith.muli %c2_i32, %c8_i32_34 : i32
    %68 = tpu.assume_multiple %67, 8 : i32
    %69 = arith.index_cast %68 : i32 to index
    %c0_35 = arith.constant 0 : index
    %70 = vector.load %arg9[%69, %c0_35] : memref<64x128xf32, #tpu.memory_space<vmem>>, vector<8x128xf32>
    %cst_36 = arith.constant dense<0.000000e+00> : vector<8x128xf32>
    %71 = tpu.matmul %64, %10, %cst_36 {dimension_numbers = #tpu.dot_dimension_numbers<[1], [0], [0], [1], [0, 0, 1, 1], [], []>} : vector<8x128xf32>, vector<128x128xf32>, vector<8x128xf32> -> vector<8x128xf32>
    %72 = arith.addf %71, %11 : vector<8x128xf32>
    %73 = arith.addf %70, %72 : vector<8x128xf32>
    %cst_37 = arith.constant 5.000000e-01 : f32
    %74 = vector.broadcast %cst_37 : f32 to vector<8x128xf32>
    %75 = arith.mulf %74, %73 : vector<8x128xf32>
    %76 = math.tanh %75 : vector<8x128xf32>
    %cst_38 = arith.constant 1.000000e+00 : f32
    %77 = vector.broadcast %cst_38 : f32 to vector<8x128xf32>
    %78 = arith.addf %76, %77 : vector<8x128xf32>
    %cst_39 = arith.constant 5.000000e-01 : f32
    %79 = vector.broadcast %cst_39 : f32 to vector<8x128xf32>
    %80 = arith.mulf %79, %78 : vector<8x128xf32>
    %c64_i32_40 = arith.constant 64 : i32
    %81 = tpu.dynamic_rotate %80 by %c64_i32_40 dim 1 : vector<8x128xf32>, i32 -> vector<8x128xf32>
    %82 = arith.mulf %81, %72 : vector<8x128xf32>
    %83 = arith.addf %70, %82 : vector<8x128xf32>
    %84 = math.tanh %83 : vector<8x128xf32>
    %c64_i32_41 = arith.constant 64 : i32
    %85 = tpu.dynamic_rotate %84 by %c64_i32_41 dim 1 : vector<8x128xf32>, i32 -> vector<8x128xf32>
    %c96_i32_42 = arith.constant 96 : i32
    %86 = tpu.dynamic_rotate %80 by %c96_i32_42 dim 1 : vector<8x128xf32>, i32 -> vector<8x128xf32>
    %cst_43 = arith.constant 1.000000e+00 : f32
    %87 = vector.broadcast %cst_43 : f32 to vector<8x128xf32>
    %88 = arith.subf %87, %86 : vector<8x128xf32>
    %89 = arith.mulf %88, %85 : vector<8x128xf32>
    %90 = arith.mulf %86, %64 : vector<8x128xf32>
    %91 = arith.addf %89, %90 : vector<8x128xf32>
    %92 = arith.index_cast %68 : i32 to index
    %c0_44 = arith.constant 0 : index
    %93 = vector.load %arg10[%92, %c0_44] : memref<64x128xf32, #tpu.memory_space<vmem>>, vector<8x128xf32>
    tpu.vector_store %arg10[%92, %c0_44], %91 {strides = array<i32>} : memref<64x128xf32, #tpu.memory_space<vmem>>, vector<8x128xf32>,
    %c3_i32 = arith.constant 3 : i32
    %c8_i32_45 = arith.constant 8 : i32
    %94 = arith.muli %c3_i32, %c8_i32_45 : i32
    %95 = tpu.assume_multiple %94, 8 : i32
    %96 = arith.index_cast %95 : i32 to index
    %c0_46 = arith.constant 0 : index
    %97 = vector.load %arg9[%96, %c0_46] : memref<64x128xf32, #tpu.memory_space<vmem>>, vector<8x128xf32>
    %cst_47 = arith.constant dense<0.000000e+00> : vector<8x128xf32>
    %98 = tpu.matmul %91, %10, %cst_47 {dimension_numbers = #tpu.dot_dimension_numbers<[1], [0], [0], [1], [0, 0, 1, 1], [], []>} : vector<8x128xf32>, vector<128x128xf32>, vector<8x128xf32> -> vector<8x128xf32>
    %99 = arith.addf %98, %11 : vector<8x128xf32>
    %100 = arith.addf %97, %99 : vector<8x128xf32>
    %cst_48 = arith.constant 5.000000e-01 : f32
    %101 = vector.broadcast %cst_48 : f32 to vector<8x128xf32>
    %102 = arith.mulf %101, %100 : vector<8x128xf32>
    %103 = math.tanh %102 : vector<8x128xf32>
    %cst_49 = arith.constant 1.000000e+00 : f32
    %104 = vector.broadcast %cst_49 : f32 to vector<8x128xf32>
    %105 = arith.addf %103, %104 : vector<8x128xf32>
    %cst_50 = arith.constant 5.000000e-01 : f32
    %106 = vector.broadcast %cst_50 : f32 to vector<8x128xf32>
    %107 = arith.mulf %106, %105 : vector<8x128xf32>
    %c64_i32_51 = arith.constant 64 : i32
    %108 = tpu.dynamic_rotate %107 by %c64_i32_51 dim 1 : vector<8x128xf32>, i32 -> vector<8x128xf32>
    %109 = arith.mulf %108, %99 : vector<8x128xf32>
    %110 = arith.addf %97, %109 : vector<8x128xf32>
    %111 = math.tanh %110 : vector<8x128xf32>
    %c64_i32_52 = arith.constant 64 : i32
    %112 = tpu.dynamic_rotate %111 by %c64_i32_52 dim 1 : vector<8x128xf32>, i32 -> vector<8x128xf32>
    %c96_i32_53 = arith.constant 96 : i32
    %113 = tpu.dynamic_rotate %107 by %c96_i32_53 dim 1 : vector<8x128xf32>, i32 -> vector<8x128xf32>
    %cst_54 = arith.constant 1.000000e+00 : f32
    %114 = vector.broadcast %cst_54 : f32 to vector<8x128xf32>
    %115 = arith.subf %114, %113 : vector<8x128xf32>
    %116 = arith.mulf %115, %112 : vector<8x128xf32>
    %117 = arith.mulf %113, %91 : vector<8x128xf32>
    %118 = arith.addf %116, %117 : vector<8x128xf32>
    %119 = arith.index_cast %95 : i32 to index
    %c0_55 = arith.constant 0 : index
    %120 = vector.load %arg10[%119, %c0_55] : memref<64x128xf32, #tpu.memory_space<vmem>>, vector<8x128xf32>
    tpu.vector_store %arg10[%119, %c0_55], %118 {strides = array<i32>} : memref<64x128xf32, #tpu.memory_space<vmem>>, vector<8x128xf32>,
    %c4_i32 = arith.constant 4 : i32
    %c8_i32_56 = arith.constant 8 : i32
    %121 = arith.muli %c4_i32, %c8_i32_56 : i32
    %122 = tpu.assume_multiple %121, 8 : i32
    %123 = arith.index_cast %122 : i32 to index
    %c0_57 = arith.constant 0 : index
    %124 = vector.load %arg9[%123, %c0_57] : memref<64x128xf32, #tpu.memory_space<vmem>>, vector<8x128xf32>
    %cst_58 = arith.constant dense<0.000000e+00> : vector<8x128xf32>
    %125 = tpu.matmul %118, %10, %cst_58 {dimension_numbers = #tpu.dot_dimension_numbers<[1], [0], [0], [1], [0, 0, 1, 1], [], []>} : vector<8x128xf32>, vector<128x128xf32>, vector<8x128xf32> -> vector<8x128xf32>
    %126 = arith.addf %125, %11 : vector<8x128xf32>
    %127 = arith.addf %124, %126 : vector<8x128xf32>
    %cst_59 = arith.constant 5.000000e-01 : f32
    %128 = vector.broadcast %cst_59 : f32 to vector<8x128xf32>
    %129 = arith.mulf %128, %127 : vector<8x128xf32>
    %130 = math.tanh %129 : vector<8x128xf32>
    %cst_60 = arith.constant 1.000000e+00 : f32
    %131 = vector.broadcast %cst_60 : f32 to vector<8x128xf32>
    %132 = arith.addf %130, %131 : vector<8x128xf32>
    %cst_61 = arith.constant 5.000000e-01 : f32
    %133 = vector.broadcast %cst_61 : f32 to vector<8x128xf32>
    %134 = arith.mulf %133, %132 : vector<8x128xf32>
    %c64_i32_62 = arith.constant 64 : i32
    %135 = tpu.dynamic_rotate %134 by %c64_i32_62 dim 1 : vector<8x128xf32>, i32 -> vector<8x128xf32>
    %136 = arith.mulf %135, %126 : vector<8x128xf32>
    %137 = arith.addf %124, %136 : vector<8x128xf32>
    %138 = math.tanh %137 : vector<8x128xf32>
    %c64_i32_63 = arith.constant 64 : i32
    %139 = tpu.dynamic_rotate %138 by %c64_i32_63 dim 1 : vector<8x128xf32>, i32 -> vector<8x128xf32>
    %c96_i32_64 = arith.constant 96 : i32
    %140 = tpu.dynamic_rotate %134 by %c96_i32_64 dim 1 : vector<8x128xf32>, i32 -> vector<8x128xf32>
    %cst_65 = arith.constant 1.000000e+00 : f32
    %141 = vector.broadcast %cst_65 : f32 to vector<8x128xf32>
    %142 = arith.subf %141, %140 : vector<8x128xf32>
    %143 = arith.mulf %142, %139 : vector<8x128xf32>
    %144 = arith.mulf %140, %118 : vector<8x128xf32>
    %145 = arith.addf %143, %144 : vector<8x128xf32>
    %146 = arith.index_cast %122 : i32 to index
    %c0_66 = arith.constant 0 : index
    %147 = vector.load %arg10[%146, %c0_66] : memref<64x128xf32, #tpu.memory_space<vmem>>, vector<8x128xf32>
    tpu.vector_store %arg10[%146, %c0_66], %145 {strides = array<i32>} : memref<64x128xf32, #tpu.memory_space<vmem>>, vector<8x128xf32>,
    %c5_i32 = arith.constant 5 : i32
    %c8_i32_67 = arith.constant 8 : i32
    %148 = arith.muli %c5_i32, %c8_i32_67 : i32
    %149 = tpu.assume_multiple %148, 8 : i32
    %150 = arith.index_cast %149 : i32 to index
    %c0_68 = arith.constant 0 : index
    %151 = vector.load %arg9[%150, %c0_68] : memref<64x128xf32, #tpu.memory_space<vmem>>, vector<8x128xf32>
    %cst_69 = arith.constant dense<0.000000e+00> : vector<8x128xf32>
    %152 = tpu.matmul %145, %10, %cst_69 {dimension_numbers = #tpu.dot_dimension_numbers<[1], [0], [0], [1], [0, 0, 1, 1], [], []>} : vector<8x128xf32>, vector<128x128xf32>, vector<8x128xf32> -> vector<8x128xf32>
    %153 = arith.addf %152, %11 : vector<8x128xf32>
    %154 = arith.addf %151, %153 : vector<8x128xf32>
    %cst_70 = arith.constant 5.000000e-01 : f32
    %155 = vector.broadcast %cst_70 : f32 to vector<8x128xf32>
    %156 = arith.mulf %155, %154 : vector<8x128xf32>
    %157 = math.tanh %156 : vector<8x128xf32>
    %cst_71 = arith.constant 1.000000e+00 : f32
    %158 = vector.broadcast %cst_71 : f32 to vector<8x128xf32>
    %159 = arith.addf %157, %158 : vector<8x128xf32>
    %cst_72 = arith.constant 5.000000e-01 : f32
    %160 = vector.broadcast %cst_72 : f32 to vector<8x128xf32>
    %161 = arith.mulf %160, %159 : vector<8x128xf32>
    %c64_i32_73 = arith.constant 64 : i32
    %162 = tpu.dynamic_rotate %161 by %c64_i32_73 dim 1 : vector<8x128xf32>, i32 -> vector<8x128xf32>
    %163 = arith.mulf %162, %153 : vector<8x128xf32>
    %164 = arith.addf %151, %163 : vector<8x128xf32>
    %165 = math.tanh %164 : vector<8x128xf32>
    %c64_i32_74 = arith.constant 64 : i32
    %166 = tpu.dynamic_rotate %165 by %c64_i32_74 dim 1 : vector<8x128xf32>, i32 -> vector<8x128xf32>
    %c96_i32_75 = arith.constant 96 : i32
    %167 = tpu.dynamic_rotate %161 by %c96_i32_75 dim 1 : vector<8x128xf32>, i32 -> vector<8x128xf32>
    %cst_76 = arith.constant 1.000000e+00 : f32
    %168 = vector.broadcast %cst_76 : f32 to vector<8x128xf32>
    %169 = arith.subf %168, %167 : vector<8x128xf32>
    %170 = arith.mulf %169, %166 : vector<8x128xf32>
    %171 = arith.mulf %167, %145 : vector<8x128xf32>
    %172 = arith.addf %170, %171 : vector<8x128xf32>
    %173 = arith.index_cast %149 : i32 to index
    %c0_77 = arith.constant 0 : index
    %174 = vector.load %arg10[%173, %c0_77] : memref<64x128xf32, #tpu.memory_space<vmem>>, vector<8x128xf32>
    tpu.vector_store %arg10[%173, %c0_77], %172 {strides = array<i32>} : memref<64x128xf32, #tpu.memory_space<vmem>>, vector<8x128xf32>,
    %c6_i32 = arith.constant 6 : i32
    %c8_i32_78 = arith.constant 8 : i32
    %175 = arith.muli %c6_i32, %c8_i32_78 : i32
    %176 = tpu.assume_multiple %175, 8 : i32
    %177 = arith.index_cast %176 : i32 to index
    %c0_79 = arith.constant 0 : index
    %178 = vector.load %arg9[%177, %c0_79] : memref<64x128xf32, #tpu.memory_space<vmem>>, vector<8x128xf32>
    %cst_80 = arith.constant dense<0.000000e+00> : vector<8x128xf32>
    %179 = tpu.matmul %172, %10, %cst_80 {dimension_numbers = #tpu.dot_dimension_numbers<[1], [0], [0], [1], [0, 0, 1, 1], [], []>} : vector<8x128xf32>, vector<128x128xf32>, vector<8x128xf32> -> vector<8x128xf32>
    %180 = arith.addf %179, %11 : vector<8x128xf32>
    %181 = arith.addf %178, %180 : vector<8x128xf32>
    %cst_81 = arith.constant 5.000000e-01 : f32
    %182 = vector.broadcast %cst_81 : f32 to vector<8x128xf32>
    %183 = arith.mulf %182, %181 : vector<8x128xf32>
    %184 = math.tanh %183 : vector<8x128xf32>
    %cst_82 = arith.constant 1.000000e+00 : f32
    %185 = vector.broadcast %cst_82 : f32 to vector<8x128xf32>
    %186 = arith.addf %184, %185 : vector<8x128xf32>
    %cst_83 = arith.constant 5.000000e-01 : f32
    %187 = vector.broadcast %cst_83 : f32 to vector<8x128xf32>
    %188 = arith.mulf %187, %186 : vector<8x128xf32>
    %c64_i32_84 = arith.constant 64 : i32
    %189 = tpu.dynamic_rotate %188 by %c64_i32_84 dim 1 : vector<8x128xf32>, i32 -> vector<8x128xf32>
    %190 = arith.mulf %189, %180 : vector<8x128xf32>
    %191 = arith.addf %178, %190 : vector<8x128xf32>
    %192 = math.tanh %191 : vector<8x128xf32>
    %c64_i32_85 = arith.constant 64 : i32
    %193 = tpu.dynamic_rotate %192 by %c64_i32_85 dim 1 : vector<8x128xf32>, i32 -> vector<8x128xf32>
    %c96_i32_86 = arith.constant 96 : i32
    %194 = tpu.dynamic_rotate %188 by %c96_i32_86 dim 1 : vector<8x128xf32>, i32 -> vector<8x128xf32>
    %cst_87 = arith.constant 1.000000e+00 : f32
    %195 = vector.broadcast %cst_87 : f32 to vector<8x128xf32>
    %196 = arith.subf %195, %194 : vector<8x128xf32>
    %197 = arith.mulf %196, %193 : vector<8x128xf32>
    %198 = arith.mulf %194, %172 : vector<8x128xf32>
    %199 = arith.addf %197, %198 : vector<8x128xf32>
    %200 = arith.index_cast %176 : i32 to index
    %c0_88 = arith.constant 0 : index
    %201 = vector.load %arg10[%200, %c0_88] : memref<64x128xf32, #tpu.memory_space<vmem>>, vector<8x128xf32>
    tpu.vector_store %arg10[%200, %c0_88], %199 {strides = array<i32>} : memref<64x128xf32, #tpu.memory_space<vmem>>, vector<8x128xf32>,
    %c7_i32 = arith.constant 7 : i32
    %c8_i32_89 = arith.constant 8 : i32
    %202 = arith.muli %c7_i32, %c8_i32_89 : i32
    %203 = tpu.assume_multiple %202, 8 : i32
    %204 = arith.index_cast %203 : i32 to index
    %c0_90 = arith.constant 0 : index
    %205 = vector.load %arg9[%204, %c0_90] : memref<64x128xf32, #tpu.memory_space<vmem>>, vector<8x128xf32>
    %cst_91 = arith.constant dense<0.000000e+00> : vector<8x128xf32>
    %206 = tpu.matmul %199, %10, %cst_91 {dimension_numbers = #tpu.dot_dimension_numbers<[1], [0], [0], [1], [0, 0, 1, 1], [], []>} : vector<8x128xf32>, vector<128x128xf32>, vector<8x128xf32> -> vector<8x128xf32>
    %207 = arith.addf %206, %11 : vector<8x128xf32>
    %208 = arith.addf %205, %207 : vector<8x128xf32>
    %cst_92 = arith.constant 5.000000e-01 : f32
    %209 = vector.broadcast %cst_92 : f32 to vector<8x128xf32>
    %210 = arith.mulf %209, %208 : vector<8x128xf32>
    %211 = math.tanh %210 : vector<8x128xf32>
    %cst_93 = arith.constant 1.000000e+00 : f32
    %212 = vector.broadcast %cst_93 : f32 to vector<8x128xf32>
    %213 = arith.addf %211, %212 : vector<8x128xf32>
    %cst_94 = arith.constant 5.000000e-01 : f32
    %214 = vector.broadcast %cst_94 : f32 to vector<8x128xf32>
    %215 = arith.mulf %214, %213 : vector<8x128xf32>
    %c64_i32_95 = arith.constant 64 : i32
    %216 = tpu.dynamic_rotate %215 by %c64_i32_95 dim 1 : vector<8x128xf32>, i32 -> vector<8x128xf32>
    %217 = arith.mulf %216, %207 : vector<8x128xf32>
    %218 = arith.addf %205, %217 : vector<8x128xf32>
    %219 = math.tanh %218 : vector<8x128xf32>
    %c64_i32_96 = arith.constant 64 : i32
    %220 = tpu.dynamic_rotate %219 by %c64_i32_96 dim 1 : vector<8x128xf32>, i32 -> vector<8x128xf32>
    %c96_i32_97 = arith.constant 96 : i32
    %221 = tpu.dynamic_rotate %215 by %c96_i32_97 dim 1 : vector<8x128xf32>, i32 -> vector<8x128xf32>
    %cst_98 = arith.constant 1.000000e+00 : f32
    %222 = vector.broadcast %cst_98 : f32 to vector<8x128xf32>
    %223 = arith.subf %222, %221 : vector<8x128xf32>
    %224 = arith.mulf %223, %220 : vector<8x128xf32>
    %225 = arith.mulf %221, %199 : vector<8x128xf32>
    %226 = arith.addf %224, %225 : vector<8x128xf32>
    %227 = arith.index_cast %203 : i32 to index
    %c0_99 = arith.constant 0 : index
    %228 = vector.load %arg10[%227, %c0_99] : memref<64x128xf32, #tpu.memory_space<vmem>>, vector<8x128xf32>
    tpu.vector_store %arg10[%227, %c0_99], %226 {strides = array<i32>} : memref<64x128xf32, #tpu.memory_space<vmem>>, vector<8x128xf32>,
    %c8_i32_100 = arith.constant 8 : i32
    %c0_101 = arith.constant 0 : index
    %c0_102 = arith.constant 0 : index
    %229 = vector.load %arg11[%c0_101, %c0_102] : memref<8x128xf32, #tpu.memory_space<vmem>>, vector<8x128xf32>
    tpu.vector_store %arg11[%c0_101, %c0_102], %226 {strides = array<i32>} : memref<8x128xf32, #tpu.memory_space<vmem>>, vector<8x128xf32>,
    %c0_103 = arith.constant 0 : index
    %c0_104 = arith.constant 0 : index
    %230 = vector.load %arg10[%c0_103, %c0_104] : memref<64x128xf32, #tpu.memory_space<vmem>>, vector<64x128xf32>
    %c0_105 = arith.constant 0 : index
    %c0_106 = arith.constant 0 : index
    %231 = vector.load %arg6[%c0_105, %c0_106] : memref<128x128xf32, #tpu.memory_space<vmem>>, vector<128x128xf32>
    %cst_107 = arith.constant dense<0.000000e+00> : vector<64x128xf32>
    %232 = tpu.matmul %230, %231, %cst_107 {dimension_numbers = #tpu.dot_dimension_numbers<[1], [0], [0], [1], [0, 0, 1, 1], [], []>} : vector<64x128xf32>, vector<128x128xf32>, vector<64x128xf32> -> vector<64x128xf32>
    %c0_108 = arith.constant 0 : index
    %c0_109 = arith.constant 0 : index
    %233 = vector.load %arg7[%c0_108, %c0_109] : memref<1x128xf32, #tpu.memory_space<vmem>>, vector<1x128xf32>
    %234 = vector.broadcast %233 : vector<1x128xf32> to vector<64x128xf32>
    %235 = arith.addf %232, %234 : vector<64x128xf32>
    %c0_110 = arith.constant 0 : index
    %c0_111 = arith.constant 0 : index
    %236 = vector.load %arg8[%c0_110, %c0_111] : memref<64x128xf32, #tpu.memory_space<vmem>>, vector<64x128xf32>
    tpu.vector_store %arg8[%c0_110, %c0_111], %235 {strides = array<i32>} : memref<64x128xf32, #tpu.memory_space<vmem>>, vector<64x128xf32>,
    return
  }
  func.func @transform_0(%arg0: i32) -> (i32, i32) {
    %c0_i32 = arith.constant 0 : i32
    %c0_i32_0 = arith.constant 0 : i32
    return %arg0, %c0_i32 : i32, i32
  }
  func.func @transform_1(%arg0: i32) -> (i32, i32) {
    %c0_i32 = arith.constant 0 : i32
    %c0_i32_0 = arith.constant 0 : i32
    %c0_i32_1 = arith.constant 0 : i32
    return %c0_i32, %c0_i32_0 : i32, i32
  }
  func.func @transform_2(%arg0: i32) -> (i32, i32) {
    %c0_i32 = arith.constant 0 : i32
    %c0_i32_0 = arith.constant 0 : i32
    %c0_i32_1 = arith.constant 0 : i32
    return %c0_i32, %c0_i32_0 : i32, i32
  }
  func.func @transform_3(%arg0: i32) -> (i32, i32) {
    %c0_i32 = arith.constant 0 : i32
    %c0_i32_0 = arith.constant 0 : i32
    %c0_i32_1 = arith.constant 0 : i32
    return %c0_i32, %c0_i32_0 : i32, i32
  }
  func.func @transform_4(%arg0: i32) -> (i32, i32) {
    %c0_i32 = arith.constant 0 : i32
    %c0_i32_0 = arith.constant 0 : i32
    %c0_i32_1 = arith.constant 0 : i32
    return %c0_i32, %c0_i32_0 : i32, i32
  }
  func.func @transform_5(%arg0: i32) -> (i32, i32) {
    %c0_i32 = arith.constant 0 : i32
    %c0_i32_0 = arith.constant 0 : i32
    %c0_i32_1 = arith.constant 0 : i32
    return %c0_i32, %c0_i32_0 : i32, i32
  }
  func.func @transform_6(%arg0: i32) -> (i32, i32) {
    %c0_i32 = arith.constant 0 : i32
    %c0_i32_0 = arith.constant 0 : i32
    %c0_i32_1 = arith.constant 0 : i32
    return %c0_i32, %c0_i32_0 : i32, i32
  }
  func.func @transform_7(%arg0: i32) -> (i32, i32) {
    %c0_i32 = arith.constant 0 : i32
    %c0_i32_0 = arith.constant 0 : i32
    return %arg0, %c0_i32 : i32, i32
  }
}

</mosaic_0001>

<llo_original>
// kernel: tpu_custom_call.1
$region0: #{tpu_custom_call.1}
  #allocation0 [shape = 'u32[]', space=smem, size = 0x4, offset = 0x4, fixed_abs, tag = 'smem constant byte address 0x4 - core index']
  #allocation1 [shape = 'u32[144,128]{1,0:T(1,128)}', space=vmem, size = 0x12000, scoped, tag = 'internal scratch']
  #allocation2 [shape = 'f32[64,128]{1,0:T(8,128)}', space=vmem, size = 0x8000, scoped, tag = 'scratch operand']
  #allocation3 [shape = 'f32[64,128]{1,0:T(8,128)}', space=vmem, size = 0x8000, scoped, tag = 'scratch operand']
  #allocation4 [shape = 'f32[8,128]{1,0:T(8,128)}', space=vmem, size = 0x1000, scoped, tag = 'scratch operand']
  %s0 = inlined_call_operand.vmem [shape: f32[64,4], index: 0, kind: input, shape index: {}]
  %s1 = inlined_call_operand.vmem [shape: f32[4,128], index: 1, kind: input, shape index: {}]
  %s2 = inlined_call_operand.hbm [shape: f32[128,128], index: 2, kind: input, shape index: {}]
  %s3 = inlined_call_operand.vmem [shape: f32[1,128], index: 3, kind: input, shape index: {}]
  %s4 = inlined_call_operand.vmem [shape: f32[8,128], index: 4, kind: input, shape index: {}]
  %s5 = inlined_call_operand.hbm [shape: f32[128,128], index: 5, kind: input, shape index: {}]
  %s6 = inlined_call_operand.vmem [shape: f32[1,128], index: 6, kind: input, shape index: {}]
  %s7 = inlined_call_operand.hbm [shape: f32[64,128], index: 7, kind: output, shape index: {}]
  %s8 = sld [smem:[#allocation0]]
  $region50: #{tpu_custom_call.1} parent=0
    _
  %s10 = ssub.s32 1, %s8
  %s11 = scalar_select 0, %s10, %s8
  $region1: #{tpu_custom_call.1} parent=0
    #allocation5 [shape = 'u8[65536]{0}', space=vmem, size = 0x10000, scoped, tag = 'input window, operand 2, single buffered']
    #allocation6 [shape = 's32[1]{0}', space=sflag, size = 0x4, scoped, tag = 'scoped memory for tpu_custom_call.1']
    #allocation7 [shape = 's32[1]{0}', space=sflag, size = 0x4, scoped, tag = 'scoped memory for tpu_custom_call.1']
    #allocation8 [shape = 'u8[65536]{0}', space=vmem, size = 0x10000, scoped, tag = 'input window, operand 5, single buffered']
    #allocation9 [shape = 's32[1]{0}', space=sflag, size = 0x4, scoped, tag = 'scoped memory for tpu_custom_call.1']
    #allocation10 [shape = 'u8[32768]{0}', space=vmem, size = 0x8000, scoped, tag = 'output window, operand 0, single buffered']
    %12 = vsyncpa [#allocation6], 0
    %13 = vsyncpa [#allocation9], 0
    %14 = vsyncpa [#allocation7], 0
    // Predicated region
    $region2: #{tpu_custom_call.1} parent=1 // pred_check
      _
    $region3: #{tpu_custom_call.1} parent=1 // pred_check_branch
      %16 = sbr.rel (0) target = $region5
    $region4: #{tpu_custom_call.1} parent=1 // pred_region
      _
    $region5: #{tpu_custom_call.1} parent=1 // pred_fallthru
      _
    // Predicated region
    $region6: #{tpu_custom_call.1} parent=1 // pred_check
      _
    $region7: #{tpu_custom_call.1} parent=1 // pred_check_branch
      %18 = sbr.rel (0) target = $region9
    $region8: #{tpu_custom_call.1} parent=1 // pred_region
      _
    $region9: #{tpu_custom_call.1} parent=1 // pred_fallthru
      _
    // Predicated region
    $region10: #{tpu_custom_call.1} parent=1 // pred_check
      _
    $region11: #{tpu_custom_call.1} parent=1 // pred_check_branch
      %20 = sbr.rel (0) target = $region13
    $region12: #{tpu_custom_call.1} parent=1 // pred_region
      %s22 = ssub.s32 2048, 2048
      %23 = vsyncadd [#allocation6], %s22
      %s24 = sshll.u32 [#allocation5], 4
      %s25 = int_to_ptr.vmem [resolvable:$true] %s24
      %30 = dma.hbm_to_vmem [thread:$0]  %s2, 2048, %s25, [#allocation6], 128, 128, 8
    $region13: #{tpu_custom_call.1} parent=1 // pred_fallthru
      _
    // Predicated region
    $region14: #{tpu_custom_call.1} parent=1 // pred_check
      _
    $region15: #{tpu_custom_call.1} parent=1 // pred_check_branch
      %32 = sbr.rel (0) target = $region17
    $region16: #{tpu_custom_call.1} parent=1 // pred_region
      _
    $region17: #{tpu_custom_call.1} parent=1 // pred_fallthru
      _
    // Predicated region
    $region18: #{tpu_custom_call.1} parent=1 // pred_check
      _
    $region19: #{tpu_custom_call.1} parent=1 // pred_check_branch
      %34 = sbr.rel (0) target = $region21
    $region20: #{tpu_custom_call.1} parent=1 // pred_region
      _
    $region21: #{tpu_custom_call.1} parent=1 // pred_fallthru
      _
    // Predicated region
    $region22: #{tpu_custom_call.1} parent=1 // pred_check
      _
    $region23: #{tpu_custom_call.1} parent=1 // pred_check_branch
      %36 = sbr.rel (0) target = $region25
    $region24: #{tpu_custom_call.1} parent=1 // pred_region
      %s38 = ssub.s32 2048, 2048
      %39 = vsyncadd [#allocation9], %s38
      %s40 = sshll.u32 [#allocation8], 4
      %s41 = int_to_ptr.vmem [resolvable:$true] %s40
      %46 = dma.hbm_to_vmem [thread:$0]  %s5, 2048, %s41, [#allocation9], 128, 128, 8
    $region25: #{tpu_custom_call.1} parent=1 // pred_fallthru
      _
    // Predicated region
    $region26: #{tpu_custom_call.1} parent=1 // pred_check
      _
    $region27: #{tpu_custom_call.1} parent=1 // pred_check_branch
      %48 = sbr.rel (0) target = $region29
    $region28: #{tpu_custom_call.1} parent=1 // pred_region
      _
    $region29: #{tpu_custom_call.1} parent=1 // pred_fallthru
      _
    // Predicated region
    $region30: #{tpu_custom_call.1} parent=1 // pred_check
      _
    $region31: #{tpu_custom_call.1} parent=1 // pred_check_branch
      %50 = sbr.rel (0) target = $region33
    $region32: #{tpu_custom_call.1} parent=1 // pred_region
      %51 = dma.done [#allocation6], 2048
    $region33: #{tpu_custom_call.1} parent=1 // pred_fallthru
      _
    // Predicated region
    $region34: #{tpu_custom_call.1} parent=1 // pred_check
      _
    $region35: #{tpu_custom_call.1} parent=1 // pred_check_branch
      %53 = sbr.rel (0) target = $region37
    $region36: #{tpu_custom_call.1} parent=1 // pred_region
      %54 = dma.done [#allocation9], 2048
    $region37: #{tpu_custom_call.1} parent=1 // pred_fallthru
      _
    %p55 = scmp.eq.s32.totalorder 0, 0
    // Predicated region
    $region38: #{tpu_custom_call.1} parent=1 // pred_check
      %p56 = pneg %p55
    $region39: #{tpu_custom_call.1} parent=1 // pred_check_branch
      %58 = sbr.rel (%p56) target = $region41
    $region40: #{tpu_custom_call.1} parent=1 // pred_region
      %59 = vst [vmem:[#allocation4] sm:$0xff] 0.0
    $region41: #{tpu_custom_call.1} parent=1 // pred_fallthru
      _
    %v60 = vld [vmem:[%s0] sm:$0xff]
    %v61 = vld [vmem:[%s0 + $0x8] sm:$0xff]
    %v62 = vld [vmem:[%s0 + $0x10] sm:$0xff]
    %v63 = vld [vmem:[%s0 + $0x18] sm:$0xff]
    %v64 = vld [vmem:[%s0 + $0x20] sm:$0xff]
    %v65 = vld [vmem:[%s0 + $0x28] sm:$0xff]
    %v66 = vld [vmem:[%s0 + $0x30] sm:$0xff]
    %v67 = vld [vmem:[%s0 + $0x38] sm:$0xff]
    %v68 = vld [vmem:[%s1] sm:$0xf]
    %v69 = vld [vmem:[%s3] sm:$0x1]
    %v71 = vlaneseq
    %v72 = vshrl.u32 %v71, 7
    %v73 = vsub.s32 0, %v72
    %v74 = vrot.slane %v69, %v73
    %vm76 = vcmask 31744
    %v78 = vsel %vm76, %v60, 0
    %v81 = vsel %vm76, %v61, 0
    %v84 = vsel %vm76, %v62, 0
    %v87 = vsel %vm76, %v63, 0
    %v90 = vsel %vm76, %v64, 0
    %v93 = vsel %vm76, %v65, 0
    %v96 = vsel %vm76, %v66, 0
    %v99 = vsel %vm76, %v67, 0
    %vm101 = vcmask 1043456
    %v103 = vsel %vm101, %v68, 0
    %105 = vmatprep.subr.mxu0 0.0
    %106 = vmatpush1.msra.mxu0 %v103
    %107 = vmatprep.subr.mxu0 0.0
    %108 = vmatpush1.msra.mxu0 0.0
    %109 = vmatprep.subr.mxu0 0.0
    %110 = vmatpush1.msra.mxu0 0.0
    %111 = vmatprep.subr.mxu0 0.0
    %112 = vmatpush1.msra.mxu0 0.0
    %113 = vmatprep.subr.mxu0 0.0
    %114 = vmatpush1.msra.mxu0 0.0
    %115 = vmatprep.subr.mxu0 0.0
    %116 = vmatpush1.msra.mxu0 0.0
    %117 = vmatprep.subr.mxu0 0.0
    %118 = vmatpush1.msra.mxu0 0.0
    %119 = vmatprep.subr.mxu0 0.0
    %120 = vmatpush1.msra.mxu0 0.0
    %121 = vmatprep.subr.mxu0 0.0
    %122 = vmatpush1.msra.mxu0 0.0
    %123 = vmatprep.subr.mxu0 0.0
    %124 = vmatpush1.msra.mxu0 0.0
    %125 = vmatprep.subr.mxu0 0.0
    %126 = vmatpush1.msra.mxu0 0.0
    %127 = vmatprep.subr.mxu0 0.0
    %128 = vmatpush1.msra.mxu0 0.0
    %129 = vmatprep.subr.mxu0 0.0
    %130 = vmatpush1.msra.mxu0 0.0
    %131 = vmatprep.subr.mxu0 0.0
    %132 = vmatpush1.msra.mxu0 0.0
    %133 = vmatprep.subr.mxu0 0.0
    %134 = vmatpush1.msra.mxu0 0.0
    %135 = vmatprep.subr.mxu0 0.0
    %136 = vmatpush1.msra.mxu0 0.0
    %137 = vmatprep.subr.mxu0 0.0
    %138 = vmatpush1.msra.mxu0 0.0
    %139 = vmatprep.subr.mxu0 0.0
    %140 = vmatpush1.msra.mxu0 0.0
    %141 = vmatprep.subr.mxu0 0.0
    %142 = vmatpush1.msra.mxu0 0.0
    %143 = vmatprep.subr.mxu0 0.0
    %144 = vmatpush1.msra.mxu0 0.0
    %145 = vmatprep.subr.mxu0 0.0
    %146 = vmatpush1.msra.mxu0 0.0
    %147 = vmatprep.subr.mxu0 0.0
    %148 = vmatpush1.msra.mxu0 0.0
    %149 = vmatprep.subr.mxu0 0.0
    %150 = vmatpush1.msra.mxu0 0.0
    %151 = vmatprep.subr.mxu0 0.0
    %152 = vmatpush1.msra.mxu0 0.0
    %153 = vmatprep.subr.mxu0 0.0
    %154 = vmatpush1.msra.mxu0 0.0
    %155 = vmatprep.subr.mxu0 0.0
    %156 = vmatpush1.msra.mxu0 0.0
    %157 = vmatprep.subr.mxu0 0.0
    %158 = vmatpush1.msra.mxu0 0.0
    %159 = vmatprep.subr.mxu0 0.0
    %160 = vmatpush1.msra.mxu0 0.0
    %161 = vmatprep.subr.mxu0 0.0
    %162 = vmatpush1.msra.mxu0 0.0
    %163 = vmatprep.subr.mxu0 0.0
    %164 = vmatpush1.msra.mxu0 0.0
    %165 = vmatprep.subr.mxu0 0.0
    %166 = vmatpush1.msra.mxu0 0.0
    %167 = vmatprep.subr.mxu0 0.0
    %168 = vmatpush1.msra.mxu0 0.0
    %169 = vmatprep.mubr.f32.mxu0 0.0
    %170 = vmatmul.mubr.f32.gmra.mrb[0].mxu0 %v78
    %v171 = vpop.f32.mrb[0].mxu0
    %v172 = vadd.f32 %v74, %v171
    %v173 = vpop.f32.mrb[0].mxu0
    %174 = vmatprep.mubr.f32.mxu0 0.0
    %175 = vmatmul.mubr.f32.gmra.mrb[0].mxu0 %v81
    %v176 = vpop.f32.mrb[0].mxu0
    %v177 = vadd.f32 %v74, %v176
    %v178 = vpop.f32.mrb[0].mxu0
    %179 = vmatprep.mubr.f32.mxu0 0.0
    %180 = vmatmul.mubr.f32.gmra.mrb[0].mxu0 %v84
    %v181 = vpop.f32.mrb[0].mxu0
    %v182 = vadd.f32 %v74, %v181
    %v183 = vpop.f32.mrb[0].mxu0
    %184 = vmatprep.mubr.f32.mxu0 0.0
    %185 = vmatmul.mubr.f32.gmra.mrb[0].mxu0 %v87
    %v186 = vpop.f32.mrb[0].mxu0
    %v187 = vadd.f32 %v74, %v186
    %v188 = vpop.f32.mrb[0].mxu0
    %189 = vmatprep.mubr.f32.mxu0 0.0
    %190 = vmatmul.mubr.f32.gmra.mrb[0].mxu0 %v90
    %v191 = vpop.f32.mrb[0].mxu0
    %v192 = vadd.f32 %v74, %v191
    %v193 = vpop.f32.mrb[0].mxu0
    %194 = vmatprep.mubr.f32.mxu0 0.0
    %195 = vmatmul.mubr.f32.gmra.mrb[0].mxu0 %v93
    %v196 = vpop.f32.mrb[0].mxu0
    %v197 = vadd.f32 %v74, %v196
    %v198 = vpop.f32.mrb[0].mxu0
    %199 = vmatprep.mubr.f32.mxu0 0.0
    %200 = vmatmul.mubr.f32.gmra.mrb[0].mxu0 %v96
    %v201 = vpop.f32.mrb[0].mxu0
    %v202 = vadd.f32 %v74, %v201
    %v203 = vpop.f32.mrb[0].mxu0
    %204 = vmatprep.mubr.f32.mxu0 0.0
    %205 = vmatmul.mubr.f32.gmra.mrb[0].mxu0 %v99
    %v206 = vpop.f32.mrb[0].mxu0
    %v207 = vadd.f32 %v74, %v206
    %v208 = vpop.f32.mrb[0].mxu0
    %209 = vdwg.mxu0
    %210 = vst [vmem:[#allocation2] sm:$0xff] %v172
    %211 = vst [vmem:[#allocation2 + $0x8] sm:$0xff] %v177
    %212 = vst [vmem:[#allocation2 + $0x10] sm:$0xff] %v182
    %213 = vst [vmem:[#allocation2 + $0x18] sm:$0xff] %v187
    %214 = vst [vmem:[#allocation2 + $0x20] sm:$0xff] %v192
    %215 = vst [vmem:[#allocation2 + $0x28] sm:$0xff] %v197
    %216 = vst [vmem:[#allocation2 + $0x30] sm:$0xff] %v202
    %217 = vst [vmem:[#allocation2 + $0x38] sm:$0xff] %v207
    %v218 = vld [vmem:[#allocation5] sm:$0xff]
    %v219 = vld [vmem:[#allocation5 + $0x8] sm:$0xff]
    %v220 = vld [vmem:[#allocation5 + $0x10] sm:$0xff]
    %v221 = vld [vmem:[#allocation5 + $0x18] sm:$0xff]
    %v222 = vld [vmem:[#allocation5 + $0x20] sm:$0xff]
    %v223 = vld [vmem:[#allocation5 + $0x28] sm:$0xff]
    %v224 = vld [vmem:[#allocation5 + $0x30] sm:$0xff]
    %v225 = vld [vmem:[#allocation5 + $0x38] sm:$0xff]
    %v226 = vld [vmem:[#allocation5 + $0x40] sm:$0xff]
    %v227 = vld [vmem:[#allocation5 + $0x48] sm:$0xff]
    %v228 = vld [vmem:[#allocation5 + $0x50] sm:$0xff]
    %v229 = vld [vmem:[#allocation5 + $0x58] sm:$0xff]
    %v230 = vld [vmem:[#allocation5 + $0x60] sm:$0xff]
    %v231 = vld [vmem:[#allocation5 + $0x68] sm:$0xff]
    %v232 = vld [vmem:[#allocation5 + $0x70] sm:$0xff]
    %v233 = vld [vmem:[#allocation5 + $0x78] sm:$0xff]
    %v234 = vld [vmem:[%s4] sm:$0xff]
    %v235 = vld [vmem:[#allocation4] sm:$0xff]
    %v236 = vld [vmem:[#allocation2] sm:$0xff]
    %237 = vmatprep.subr.mxu0 0.0
    %238 = vmatpush1.msra.mxu0 %v218
    %239 = vmatprep.subr.mxu0 0.0
    %240 = vmatpush1.msra.mxu0 %v219
    %241 = vmatprep.subr.mxu0 0.0
    %242 = vmatpush1.msra.mxu0 %v220
    %243 = vmatprep.subr.mxu0 0.0
    %244 = vmatpush1.msra.mxu0 %v221
    %245 = vmatprep.subr.mxu0 0.0
    %246 = vmatpush1.msra.mxu0 %v222
    %247 = vmatprep.subr.mxu0 0.0
    %248 = vmatpush1.msra.mxu0 %v223
    %249 = vmatprep.subr.mxu0 0.0
    %250 = vmatpush1.msra.mxu0 %v224
    %251 = vmatprep.subr.mxu0 0.0
    %252 = vmatpush1.msra.mxu0 %v225
    %253 = vmatprep.subr.mxu0 0.0
    %254 = vmatpush1.msra.mxu0 %v226
    %255 = vmatprep.subr.mxu0 0.0
    %256 = vmatpush1.msra.mxu0 %v227
    %257 = vmatprep.subr.mxu0 0.0
    %258 = vmatpush1.msra.mxu0 %v228
    %259 = vmatprep.subr.mxu0 0.0
    %260 = vmatpush1.msra.mxu0 %v229
    %261 = vmatprep.subr.mxu0 0.0
    %262 = vmatpush1.msra.mxu0 %v230
    %263 = vmatprep.subr.mxu0 0.0
    %264 = vmatpush1.msra.mxu0 %v231
    %265 = vmatprep.subr.mxu0 0.0
    %266 = vmatpush1.msra.mxu0 %v232
    %267 = vmatprep.subr.mxu0 0.0
    %268 = vmatpush1.msra.mxu0 %v233
    %269 = vmatprep.subr.mxu0 0.0
    %270 = vmatpush1.msra.mxu0 0.0
    %271 = vmatprep.subr.mxu0 0.0
    %272 = vmatpush1.msra.mxu0 0.0
    %273 = vmatprep.subr.mxu0 0.0
    %274 = vmatpush1.msra.mxu0 0.0
    %275 = vmatprep.subr.mxu0 0.0
    %276 = vmatpush1.msra.mxu0 0.0
    %277 = vmatprep.subr.mxu0 0.0
    %278 = vmatpush1.msra.mxu0 0.0
    %279 = vmatprep.subr.mxu0 0.0
    %280 = vmatpush1.msra.mxu0 0.0
    %281 = vmatprep.subr.mxu0 0.0
    %282 = vmatpush1.msra.mxu0 0.0
    %283 = vmatprep.subr.mxu0 0.0
    %284 = vmatpush1.msra.mxu0 0.0
    %285 = vmatprep.subr.mxu0 0.0
    %286 = vmatpush1.msra.mxu0 0.0
    %287 = vmatprep.subr.mxu0 0.0
    %288 = vmatpush1.msra.mxu0 0.0
    %289 = vmatprep.subr.mxu0 0.0
    %290 = vmatpush1.msra.mxu0 0.0
    %291 = vmatprep.subr.mxu0 0.0
    %292 = vmatpush1.msra.mxu0 0.0
    %293 = vmatprep.subr.mxu0 0.0
    %294 = vmatpush1.msra.mxu0 0.0
    %295 = vmatprep.subr.mxu0 0.0
    %296 = vmatpush1.msra.mxu0 0.0
    %297 = vmatprep.subr.mxu0 0.0
    %298 = vmatpush1.msra.mxu0 0.0
    %299 = vmatprep.subr.mxu0 0.0
    %300 = vmatpush1.msra.mxu0 0.0
    %301 = vmatprep.mubr.f32.mxu0 0.0
    %302 = vmatmul.mubr.f32.gmra.mrb[0].mxu0 %v235
    %v303 = vpop.f32.mrb[0].mxu0
    %v304 = vadd.f32 %v234, %v303
    %v305 = vpop.f32.mrb[0].mxu0
    %306 = vdwg.mxu0
    %v307 = vadd.f32 %v236, %v304
    %v308 = vmul.f32 %v307, 0.5
    %v309 = vtanh.pop %v308
    %v310 = vadd.f32 %v309, 1.0
    %v311 = vmul.f32 %v310, 0.5
    %312 = vrot.lane.b32.xlu0 %v311, 64
    %v313 = vpop.permute.xlu0 %312
    %v314 = vmul.f32 %v313, %v304
    %v315 = vadd.f32 %v236, %v314
    %v316 = vtanh.pop %v315
    %317 = vrot.lane.b32.xlu0 %v316, 64
    %v318 = vpop.permute.xlu0 %317
    %319 = vrot.lane.b32.xlu0 %v311, 96
    %v320 = vpop.permute.xlu0 %319
    %v321 = vsub.f32 1.0, %v320
    %v322 = vmul.f32 %v321, %v318
    %v323 = vmul.f32 %v320, %v235
    %v324 = vadd.f32 %v322, %v323
    %325 = vst [vmem:[#allocation3] sm:$0xff] %v324
    %s326 = scalar_lea.vmem [#allocation2], 8
    %v327 = vld [vmem:[%s326] sm:$0xff]
    %328 = vmatprep.subr.mxu0 0.0
    %329 = vmatpush1.msra.mxu0 %v218
    %330 = vmatprep.subr.mxu0 0.0
    %331 = vmatpush1.msra.mxu0 %v219
    %332 = vmatprep.subr.mxu0 0.0
    %333 = vmatpush1.msra.mxu0 %v220
    %334 = vmatprep.subr.mxu0 0.0
    %335 = vmatpush1.msra.mxu0 %v221
    %336 = vmatprep.subr.mxu0 0.0
    %337 = vmatpush1.msra.mxu0 %v222
    %338 = vmatprep.subr.mxu0 0.0
    %339 = vmatpush1.msra.mxu0 %v223
    %340 = vmatprep.subr.mxu0 0.0
    %341 = vmatpush1.msra.mxu0 %v224
    %342 = vmatprep.subr.mxu0 0.0
    %343 = vmatpush1.msra.mxu0 %v225
    %344 = vmatprep.subr.mxu0 0.0
    %345 = vmatpush1.msra.mxu0 %v226
    %346 = vmatprep.subr.mxu0 0.0
    %347 = vmatpush1.msra.mxu0 %v227
    %348 = vmatprep.subr.mxu0 0.0
    %349 = vmatpush1.msra.mxu0 %v228
    %350 = vmatprep.subr.mxu0 0.0
    %351 = vmatpush1.msra.mxu0 %v229
    %352 = vmatprep.subr.mxu0 0.0
    %353 = vmatpush1.msra.mxu0 %v230
    %354 = vmatprep.subr.mxu0 0.0
    %355 = vmatpush1.msra.mxu0 %v231
    %356 = vmatprep.subr.mxu0 0.0
    %357 = vmatpush1.msra.mxu0 %v232
    %358 = vmatprep.subr.mxu0 0.0
    %359 = vmatpush1.msra.mxu0 %v233
    %360 = vmatprep.subr.mxu0 0.0
    %361 = vmatpush1.msra.mxu0 0.0
    %362 = vmatprep.subr.mxu0 0.0
    %363 = vmatpush1.msra.mxu0 0.0
    %364 = vmatprep.subr.mxu0 0.0
    %365 = vmatpush1.msra.mxu0 0.0
    %366 = vmatprep.subr.mxu0 0.0
    %367 = vmatpush1.msra.mxu0 0.0
    %368 = vmatprep.subr.mxu0 0.0
    %369 = vmatpush1.msra.mxu0 0.0
    %370 = vmatprep.subr.mxu0 0.0
    %371 = vmatpush1.msra.mxu0 0.0
    %372 = vmatprep.subr.mxu0 0.0
    %373 = vmatpush1.msra.mxu0 0.0
    %374 = vmatprep.subr.mxu0 0.0
    %375 = vmatpush1.msra.mxu0 0.0
    %376 = vmatprep.subr.mxu0 0.0
    %377 = vmatpush1.msra.mxu0 0.0
    %378 = vmatprep.subr.mxu0 0.0
    %379 = vmatpush1.msra.mxu0 0.0
    %380 = vmatprep.subr.mxu0 0.0
    %381 = vmatpush1.msra.mxu0 0.0
    %382 = vmatprep.subr.mxu0 0.0
    %383 = vmatpush1.msra.mxu0 0.0
    %384 = vmatprep.subr.mxu0 0.0
    %385 = vmatpush1.msra.mxu0 0.0
    %386 = vmatprep.subr.mxu0 0.0
    %387 = vmatpush1.msra.mxu0 0.0
    %388 = vmatprep.subr.mxu0 0.0
    %389 = vmatpush1.msra.mxu0 0.0
    %390 = vmatprep.subr.mxu0 0.0
    %391 = vmatpush1.msra.mxu0 0.0
    %392 = vmatprep.mubr.f32.mxu0 0.0
    %393 = vmatmul.mubr.f32.gmra.mrb[0].mxu0 %v324
    %v394 = vpop.f32.mrb[0].mxu0
    %v395 = vadd.f32 %v234, %v394
    %v396 = vpop.f32.mrb[0].mxu0
    %397 = vdwg.mxu0
    %v398 = vadd.f32 %v327, %v395
    %v399 = vmul.f32 %v398, 0.5
    %v400 = vtanh.pop %v399
    %v401 = vadd.f32 %v400, 1.0
    %v402 = vmul.f32 %v401, 0.5
    %403 = vrot.lane.b32.xlu0 %v402, 64
    %v404 = vpop.permute.xlu0 %403
    %v405 = vmul.f32 %v404, %v395
    %v406 = vadd.f32 %v327, %v405
    %v407 = vtanh.pop %v406
    %408 = vrot.lane.b32.xlu0 %v407, 64
    %v409 = vpop.permute.xlu0 %408
    %410 = vrot.lane.b32.xlu0 %v402, 96
    %v411 = vpop.permute.xlu0 %410
    %v412 = vsub.f32 1.0, %v411
    %v413 = vmul.f32 %v412, %v409
    %v414 = vmul.f32 %v411, %v324
    %v415 = vadd.f32 %v413, %v414
    %s416 = scalar_lea.vmem [#allocation3], 8
    %417 = vst [vmem:[%s416] sm:$0xff] %v415
    %s418 = scalar_lea.vmem [#allocation2], 16
    %v419 = vld [vmem:[%s418] sm:$0xff]
    %420 = vmatprep.subr.mxu0 0.0
    %421 = vmatpush1.msra.mxu0 %v218
    %422 = vmatprep.subr.mxu0 0.0
    %423 = vmatpush1.msra.mxu0 %v219
    %424 = vmatprep.subr.mxu0 0.0
    %425 = vmatpush1.msra.mxu0 %v220
    %426 = vmatprep.subr.mxu0 0.0
    %427 = vmatpush1.msra.mxu0 %v221
    %428 = vmatprep.subr.mxu0 0.0
    %429 = vmatpush1.msra.mxu0 %v222
    %430 = vmatprep.subr.mxu0 0.0
    %431 = vmatpush1.msra.mxu0 %v223
    %432 = vmatprep.subr.mxu0 0.0
    %433 = vmatpush1.msra.mxu0 %v224
    %434 = vmatprep.subr.mxu0 0.0
    %435 = vmatpush1.msra.mxu0 %v225
    %436 = vmatprep.subr.mxu0 0.0
    %437 = vmatpush1.msra.mxu0 %v226
    %438 = vmatprep.subr.mxu0 0.0
    %439 = vmatpush1.msra.mxu0 %v227
    %440 = vmatprep.subr.mxu0 0.0
    %441 = vmatpush1.msra.mxu0 %v228
    %442 = vmatprep.subr.mxu0 0.0
    %443 = vmatpush1.msra.mxu0 %v229
    %444 = vmatprep.subr.mxu0 0.0
    %445 = vmatpush1.msra.mxu0 %v230
    %446 = vmatprep.subr.mxu0 0.0
    %447 = vmatpush1.msra.mxu0 %v231
    %448 = vmatprep.subr.mxu0 0.0
    %449 = vmatpush1.msra.mxu0 %v232
    %450 = vmatprep.subr.mxu0 0.0
    %451 = vmatpush1.msra.mxu0 %v233
    %452 = vmatprep.subr.mxu0 0.0
    %453 = vmatpush1.msra.mxu0 0.0
    %454 = vmatprep.subr.mxu0 0.0
    %455 = vmatpush1.msra.mxu0 0.0
    %456 = vmatprep.subr.mxu0 0.0
    %457 = vmatpush1.msra.mxu0 0.0
    %458 = vmatprep.subr.mxu0 0.0
    %459 = vmatpush1.msra.mxu0 0.0
    %460 = vmatprep.subr.mxu0 0.0
    %461 = vmatpush1.msra.mxu0 0.0
    %462 = vmatprep.subr.mxu0 0.0
    %463 = vmatpush1.msra.mxu0 0.0
    %464 = vmatprep.subr.mxu0 0.0
    %465 = vmatpush1.msra.mxu0 0.0
    %466 = vmatprep.subr.mxu0 0.0
    %467 = vmatpush1.msra.mxu0 0.0
    %468 = vmatprep.subr.mxu0 0.0
    %469 = vmatpush1.msra.mxu0 0.0
    %470 = vmatprep.subr.mxu0 0.0
    %471 = vmatpush1.msra.mxu0 0.0
    %472 = vmatprep.subr.mxu0 0.0
    %473 = vmatpush1.msra.mxu0 0.0
    %474 = vmatprep.subr.mxu0 0.0
    %475 = vmatpush1.msra.mxu0 0.0
    %476 = vmatprep.subr.mxu0 0.0
    %477 = vmatpush1.msra.mxu0 0.0
    %478 = vmatprep.subr.mxu0 0.0
    %479 = vmatpush1.msra.mxu0 0.0
    %480 = vmatprep.subr.mxu0 0.0
    %481 = vmatpush1.msra.mxu0 0.0
    %482 = vmatprep.subr.mxu0 0.0
    %483 = vmatpush1.msra.mxu0 0.0
    %484 = vmatprep.mubr.f32.mxu0 0.0
    %485 = vmatmul.mubr.f32.gmra.mrb[0].mxu0 %v415
    %v486 = vpop.f32.mrb[0].mxu0
    %v487 = vadd.f32 %v234, %v486
    %v488 = vpop.f32.mrb[0].mxu0
    %489 = vdwg.mxu0
    %v490 = vadd.f32 %v419, %v487
    %v491 = vmul.f32 %v490, 0.5
    %v492 = vtanh.pop %v491
    %v493 = vadd.f32 %v492, 1.0
    %v494 = vmul.f32 %v493, 0.5
    %495 = vrot.lane.b32.xlu0 %v494, 64
    %v496 = vpop.permute.xlu0 %495
    %v497 = vmul.f32 %v496, %v487
    %v498 = vadd.f32 %v419, %v497
    %v499 = vtanh.pop %v498
    %500 = vrot.lane.b32.xlu0 %v499, 64
    %v501 = vpop.permute.xlu0 %500
    %502 = vrot.lane.b32.xlu0 %v494, 96
    %v503 = vpop.permute.xlu0 %502
    %v504 = vsub.f32 1.0, %v503
    %v505 = vmul.f32 %v504, %v501
    %v506 = vmul.f32 %v503, %v415
    %v507 = vadd.f32 %v505, %v506
    %s508 = scalar_lea.vmem [#allocation3], 16
    %509 = vst [vmem:[%s508] sm:$0xff] %v507
    %s510 = scalar_lea.vmem [#allocation2], 24
    %v511 = vld [vmem:[%s510] sm:$0xff]
    %512 = vmatprep.subr.mxu0 0.0
    %513 = vmatpush1.msra.mxu0 %v218
    %514 = vmatprep.subr.mxu0 0.0
    %515 = vmatpush1.msra.mxu0 %v219
    %516 = vmatprep.subr.mxu0 0.0
    %517 = vmatpush1.msra.mxu0 %v220
    %518 = vmatprep.subr.mxu0 0.0
    %519 = vmatpush1.msra.mxu0 %v221
    %520 = vmatprep.subr.mxu0 0.0
    %521 = vmatpush1.msra.mxu0 %v222
    %522 = vmatprep.subr.mxu0 0.0
    %523 = vmatpush1.msra.mxu0 %v223
    %524 = vmatprep.subr.mxu0 0.0
    %525 = vmatpush1.msra.mxu0 %v224
    %526 = vmatprep.subr.mxu0 0.0
    %527 = vmatpush1.msra.mxu0 %v225
    %528 = vmatprep.subr.mxu0 0.0
    %529 = vmatpush1.msra.mxu0 %v226
    %530 = vmatprep.subr.mxu0 0.0
    %531 = vmatpush1.msra.mxu0 %v227
    %532 = vmatprep.subr.mxu0 0.0
    %533 = vmatpush1.msra.mxu0 %v228
    %534 = vmatprep.subr.mxu0 0.0
    %535 = vmatpush1.msra.mxu0 %v229
    %536 = vmatprep.subr.mxu0 0.0
    %537 = vmatpush1.msra.mxu0 %v230
    %538 = vmatprep.subr.mxu0 0.0
    %539 = vmatpush1.msra.mxu0 %v231
    %540 = vmatprep.subr.mxu0 0.0
    %541 = vmatpush1.msra.mxu0 %v232
    %542 = vmatprep.subr.mxu0 0.0
    %543 = vmatpush1.msra.mxu0 %v233
    %544 = vmatprep.subr.mxu0 0.0
    %545 = vmatpush1.msra.mxu0 0.0
    %546 = vmatprep.subr.mxu0 0.0
    %547 = vmatpush1.msra.mxu0 0.0
    %548 = vmatprep.subr.mxu0 0.0
    %549 = vmatpush1.msra.mxu0 0.0
    %550 = vmatprep.subr.mxu0 0.0
    %551 = vmatpush1.msra.mxu0 0.0
    %552 = vmatprep.subr.mxu0 0.0
    %553 = vmatpush1.msra.mxu0 0.0
    %554 = vmatprep.subr.mxu0 0.0
    %555 = vmatpush1.msra.mxu0 0.0
    %556 = vmatprep.subr.mxu0 0.0
    %557 = vmatpush1.msra.mxu0 0.0
    %558 = vmatprep.subr.mxu0 0.0
    %559 = vmatpush1.msra.mxu0 0.0
    %560 = vmatprep.subr.mxu0 0.0
    %561 = vmatpush1.msra.mxu0 0.0
    %562 = vmatprep.subr.mxu0 0.0
    %563 = vmatpush1.msra.mxu0 0.0
    %564 = vmatprep.subr.mxu0 0.0
    %565 = vmatpush1.msra.mxu0 0.0
    %566 = vmatprep.subr.mxu0 0.0
    %567 = vmatpush1.msra.mxu0 0.0
    %568 = vmatprep.subr.mxu0 0.0
    %569 = vmatpush1.msra.mxu0 0.0
    %570 = vmatprep.subr.mxu0 0.0
    %571 = vmatpush1.msra.mxu0 0.0
    %572 = vmatprep.subr.mxu0 0.0
    %573 = vmatpush1.msra.mxu0 0.0
    %574 = vmatprep.subr.mxu0 0.0
    %575 = vmatpush1.msra.mxu0 0.0
    %576 = vmatprep.mubr.f32.mxu0 0.0
    %577 = vmatmul.mubr.f32.gmra.mrb[0].mxu0 %v507
    %v578 = vpop.f32.mrb[0].mxu0
    %v579 = vadd.f32 %v234, %v578
    %v580 = vpop.f32.mrb[0].mxu0
    %581 = vdwg.mxu0
    %v582 = vadd.f32 %v511, %v579
    %v583 = vmul.f32 %v582, 0.5
    %v584 = vtanh.pop %v583
    %v585 = vadd.f32 %v584, 1.0
    %v586 = vmul.f32 %v585, 0.5
    %587 = vrot.lane.b32.xlu0 %v586, 64
    %v588 = vpop.permute.xlu0 %587
    %v589 = vmul.f32 %v588, %v579
    %v590 = vadd.f32 %v511, %v589
    %v591 = vtanh.pop %v590
    %592 = vrot.lane.b32.xlu0 %v591, 64
    %v593 = vpop.permute.xlu0 %592
    %594 = vrot.lane.b32.xlu0 %v586, 96
    %v595 = vpop.permute.xlu0 %594
    %v596 = vsub.f32 1.0, %v595
    %v597 = vmul.f32 %v596, %v593
    %v598 = vmul.f32 %v595, %v507
    %v599 = vadd.f32 %v597, %v598
    %s600 = scalar_lea.vmem [#allocation3], 24
    %601 = vst [vmem:[%s600] sm:$0xff] %v599
    %s602 = scalar_lea.vmem [#allocation2], 32
    %v603 = vld [vmem:[%s602] sm:$0xff]
    %604 = vmatprep.subr.mxu0 0.0
    %605 = vmatpush1.msra.mxu0 %v218
    %606 = vmatprep.subr.mxu0 0.0
    %607 = vmatpush1.msra.mxu0 %v219
    %608 = vmatprep.subr.mxu0 0.0
    %609 = vmatpush1.msra.mxu0 %v220
    %610 = vmatprep.subr.mxu0 0.0
    %611 = vmatpush1.msra.mxu0 %v221
    %612 = vmatprep.subr.mxu0 0.0
    %613 = vmatpush1.msra.mxu0 %v222
    %614 = vmatprep.subr.mxu0 0.0
    %615 = vmatpush1.msra.mxu0 %v223
    %616 = vmatprep.subr.mxu0 0.0
    %617 = vmatpush1.msra.mxu0 %v224
    %618 = vmatprep.subr.mxu0 0.0
    %619 = vmatpush1.msra.mxu0 %v225
    %620 = vmatprep.subr.mxu0 0.0
    %621 = vmatpush1.msra.mxu0 %v226
    %622 = vmatprep.subr.mxu0 0.0
    %623 = vmatpush1.msra.mxu0 %v227
    %624 = vmatprep.subr.mxu0 0.0
    %625 = vmatpush1.msra.mxu0 %v228
    %626 = vmatprep.subr.mxu0 0.0
    %627 = vmatpush1.msra.mxu0 %v229
    %628 = vmatprep.subr.mxu0 0.0
    %629 = vmatpush1.msra.mxu0 %v230
    %630 = vmatprep.subr.mxu0 0.0
    %631 = vmatpush1.msra.mxu0 %v231
    %632 = vmatprep.subr.mxu0 0.0
    %633 = vmatpush1.msra.mxu0 %v232
    %634 = vmatprep.subr.mxu0 0.0
    %635 = vmatpush1.msra.mxu0 %v233
    %636 = vmatprep.subr.mxu0 0.0
    %637 = vmatpush1.msra.mxu0 0.0
    %638 = vmatprep.subr.mxu0 0.0
    %639 = vmatpush1.msra.mxu0 0.0
    %640 = vmatprep.subr.mxu0 0.0
    %641 = vmatpush1.msra.mxu0 0.0
    %642 = vmatprep.subr.mxu0 0.0
    %643 = vmatpush1.msra.mxu0 0.0
    %644 = vmatprep.subr.mxu0 0.0
    %645 = vmatpush1.msra.mxu0 0.0
    %646 = vmatprep.subr.mxu0 0.0
    %647 = vmatpush1.msra.mxu0 0.0
    %648 = vmatprep.subr.mxu0 0.0
    %649 = vmatpush1.msra.mxu0 0.0
    %650 = vmatprep.subr.mxu0 0.0
    %651 = vmatpush1.msra.mxu0 0.0
    %652 = vmatprep.subr.mxu0 0.0
    %653 = vmatpush1.msra.mxu0 0.0
    %654 = vmatprep.subr.mxu0 0.0
    %655 = vmatpush1.msra.mxu0 0.0
    %656 = vmatprep.subr.mxu0 0.0
    %657 = vmatpush1.msra.mxu0 0.0
    %658 = vmatprep.subr.mxu0 0.0
    %659 = vmatpush1.msra.mxu0 0.0
    %660 = vmatprep.subr.mxu0 0.0
    %661 = vmatpush1.msra.mxu0 0.0
    %662 = vmatprep.subr.mxu0 0.0
    %663 = vmatpush1.msra.mxu0 0.0
    %664 = vmatprep.subr.mxu0 0.0
    %665 = vmatpush1.msra.mxu0 0.0
    %666 = vmatprep.subr.mxu0 0.0
    %667 = vmatpush1.msra.mxu0 0.0
    %668 = vmatprep.mubr.f32.mxu0 0.0
    %669 = vmatmul.mubr.f32.gmra.mrb[0].mxu0 %v599
    %v670 = vpop.f32.mrb[0].mxu0
    %v671 = vadd.f32 %v234, %v670
    %v672 = vpop.f32.mrb[0].mxu0
    %673 = vdwg.mxu0
    %v674 = vadd.f32 %v603, %v671
    %v675 = vmul.f32 %v674, 0.5
    %v676 = vtanh.pop %v675
    %v677 = vadd.f32 %v676, 1.0
    %v678 = vmul.f32 %v677, 0.5
    %679 = vrot.lane.b32.xlu0 %v678, 64
    %v680 = vpop.permute.xlu0 %679
    %v681 = vmul.f32 %v680, %v671
    %v682 = vadd.f32 %v603, %v681
    %v683 = vtanh.pop %v682
    %684 = vrot.lane.b32.xlu0 %v683, 64
    %v685 = vpop.permute.xlu0 %684
    %686 = vrot.lane.b32.xlu0 %v678, 96
    %v687 = vpop.permute.xlu0 %686
    %v688 = vsub.f32 1.0, %v687
    %v689 = vmul.f32 %v688, %v685
    %v690 = vmul.f32 %v687, %v599
    %v691 = vadd.f32 %v689, %v690
    %s692 = scalar_lea.vmem [#allocation3], 32
    %693 = vst [vmem:[%s692] sm:$0xff] %v691
    %s694 = scalar_lea.vmem [#allocation2], 40
    %v695 = vld [vmem:[%s694] sm:$0xff]
    %696 = vmatprep.subr.mxu0 0.0
    %697 = vmatpush1.msra.mxu0 %v218
    %698 = vmatprep.subr.mxu0 0.0
    %699 = vmatpush1.msra.mxu0 %v219
    %700 = vmatprep.subr.mxu0 0.0
    %701 = vmatpush1.msra.mxu0 %v220
    %702 = vmatprep.subr.mxu0 0.0
    %703 = vmatpush1.msra.mxu0 %v221
    %704 = vmatprep.subr.mxu0 0.0
    %705 = vmatpush1.msra.mxu0 %v222
    %706 = vmatprep.subr.mxu0 0.0
    %707 = vmatpush1.msra.mxu0 %v223
    %708 = vmatprep.subr.mxu0 0.0
    %709 = vmatpush1.msra.mxu0 %v224
    %710 = vmatprep.subr.mxu0 0.0
    %711 = vmatpush1.msra.mxu0 %v225
    %712 = vmatprep.subr.mxu0 0.0
    %713 = vmatpush1.msra.mxu0 %v226
    %714 = vmatprep.subr.mxu0 0.0
    %715 = vmatpush1.msra.mxu0 %v227
    %716 = vmatprep.subr.mxu0 0.0
    %717 = vmatpush1.msra.mxu0 %v228
    %718 = vmatprep.subr.mxu0 0.0
    %719 = vmatpush1.msra.mxu0 %v229
    %720 = vmatprep.subr.mxu0 0.0
    %721 = vmatpush1.msra.mxu0 %v230
    %722 = vmatprep.subr.mxu0 0.0
    %723 = vmatpush1.msra.mxu0 %v231
    %724 = vmatprep.subr.mxu0 0.0
    %725 = vmatpush1.msra.mxu0 %v232
    %726 = vmatprep.subr.mxu0 0.0
    %727 = vmatpush1.msra.mxu0 %v233
    %728 = vmatprep.subr.mxu0 0.0
    %729 = vmatpush1.msra.mxu0 0.0
    %730 = vmatprep.subr.mxu0 0.0
    %731 = vmatpush1.msra.mxu0 0.0
    %732 = vmatprep.subr.mxu0 0.0
    %733 = vmatpush1.msra.mxu0 0.0
    %734 = vmatprep.subr.mxu0 0.0
    %735 = vmatpush1.msra.mxu0 0.0
    %736 = vmatprep.subr.mxu0 0.0
    %737 = vmatpush1.msra.mxu0 0.0
    %738 = vmatprep.subr.mxu0 0.0
    %739 = vmatpush1.msra.mxu0 0.0
    %740 = vmatprep.subr.mxu0 0.0
    %741 = vmatpush1.msra.mxu0 0.0
    %742 = vmatprep.subr.mxu0 0.0
    %743 = vmatpush1.msra.mxu0 0.0
    %744 = vmatprep.subr.mxu0 0.0
    %745 = vmatpush1.msra.mxu0 0.0
    %746 = vmatprep.subr.mxu0 0.0
    %747 = vmatpush1.msra.mxu0 0.0
    %748 = vmatprep.subr.mxu0 0.0
    %749 = vmatpush1.msra.mxu0 0.0
    %750 = vmatprep.subr.mxu0 0.0
    %751 = vmatpush1.msra.mxu0 0.0
    %752 = vmatprep.subr.mxu0 0.0
    %753 = vmatpush1.msra.mxu0 0.0
    %754 = vmatprep.subr.mxu0 0.0
    %755 = vmatpush1.msra.mxu0 0.0
    %756 = vmatprep.subr.mxu0 0.0
    %757 = vmatpush1.msra.mxu0 0.0
    %758 = vmatprep.subr.mxu0 0.0
    %759 = vmatpush1.msra.mxu0 0.0
    %760 = vmatprep.mubr.f32.mxu0 0.0
    %761 = vmatmul.mubr.f32.gmra.mrb[0].mxu0 %v691
    %v762 = vpop.f32.mrb[0].mxu0
    %v763 = vadd.f32 %v234, %v762
    %v764 = vpop.f32.mrb[0].mxu0
    %765 = vdwg.mxu0
    %v766 = vadd.f32 %v695, %v763
    %v767 = vmul.f32 %v766, 0.5
    %v768 = vtanh.pop %v767
    %v769 = vadd.f32 %v768, 1.0
    %v770 = vmul.f32 %v769, 0.5
    %771 = vrot.lane.b32.xlu0 %v770, 64
    %v772 = vpop.permute.xlu0 %771
    %v773 = vmul.f32 %v772, %v763
    %v774 = vadd.f32 %v695, %v773
    %v775 = vtanh.pop %v774
    %776 = vrot.lane.b32.xlu0 %v775, 64
    %v777 = vpop.permute.xlu0 %776
    %778 = vrot.lane.b32.xlu0 %v770, 96
    %v779 = vpop.permute.xlu0 %778
    %v780 = vsub.f32 1.0, %v779
    %v781 = vmul.f32 %v780, %v777
    %v782 = vmul.f32 %v779, %v691
    %v783 = vadd.f32 %v781, %v782
    %s784 = scalar_lea.vmem [#allocation3], 40
    %785 = vst [vmem:[%s784] sm:$0xff] %v783
    %s786 = scalar_lea.vmem [#allocation2], 48
    %v787 = vld [vmem:[%s786] sm:$0xff]
    %788 = vmatprep.subr.mxu0 0.0
    %789 = vmatpush1.msra.mxu0 %v218
    %790 = vmatprep.subr.mxu0 0.0
    %791 = vmatpush1.msra.mxu0 %v219
    %792 = vmatprep.subr.mxu0 0.0
    %793 = vmatpush1.msra.mxu0 %v220
    %794 = vmatprep.subr.mxu0 0.0
    %795 = vmatpush1.msra.mxu0 %v221
    %796 = vmatprep.subr.mxu0 0.0
    %797 = vmatpush1.msra.mxu0 %v222
    %798 = vmatprep.subr.mxu0 0.0
    %799 = vmatpush1.msra.mxu0 %v223
    %800 = vmatprep.subr.mxu0 0.0
    %801 = vmatpush1.msra.mxu0 %v224
    %802 = vmatprep.subr.mxu0 0.0
    %803 = vmatpush1.msra.mxu0 %v225
    %804 = vmatprep.subr.mxu0 0.0
    %805 = vmatpush1.msra.mxu0 %v226
    %806 = vmatprep.subr.mxu0 0.0
    %807 = vmatpush1.msra.mxu0 %v227
    %808 = vmatprep.subr.mxu0 0.0
    %809 = vmatpush1.msra.mxu0 %v228
    %810 = vmatprep.subr.mxu0 0.0
    %811 = vmatpush1.msra.mxu0 %v229
    %812 = vmatprep.subr.mxu0 0.0
    %813 = vmatpush1.msra.mxu0 %v230
    %814 = vmatprep.subr.mxu0 0.0
    %815 = vmatpush1.msra.mxu0 %v231
    %816 = vmatprep.subr.mxu0 0.0
    %817 = vmatpush1.msra.mxu0 %v232
    %818 = vmatprep.subr.mxu0 0.0
    %819 = vmatpush1.msra.mxu0 %v233
    %820 = vmatprep.subr.mxu0 0.0
    %821 = vmatpush1.msra.mxu0 0.0
    %822 = vmatprep.subr.mxu0 0.0
    %823 = vmatpush1.msra.mxu0 0.0
    %824 = vmatprep.subr.mxu0 0.0
    %825 = vmatpush1.msra.mxu0 0.0
    %826 = vmatprep.subr.mxu0 0.0
    %827 = vmatpush1.msra.mxu0 0.0
    %828 = vmatprep.subr.mxu0 0.0
    %829 = vmatpush1.msra.mxu0 0.0
    %830 = vmatprep.subr.mxu0 0.0
    %831 = vmatpush1.msra.mxu0 0.0
    %832 = vmatprep.subr.mxu0 0.0
    %833 = vmatpush1.msra.mxu0 0.0
    %834 = vmatprep.subr.mxu0 0.0
    %835 = vmatpush1.msra.mxu0 0.0
    %836 = vmatprep.subr.mxu0 0.0
    %837 = vmatpush1.msra.mxu0 0.0
    %838 = vmatprep.subr.mxu0 0.0
    %839 = vmatpush1.msra.mxu0 0.0
    %840 = vmatprep.subr.mxu0 0.0
    %841 = vmatpush1.msra.mxu0 0.0
    %842 = vmatprep.subr.mxu0 0.0
    %843 = vmatpush1.msra.mxu0 0.0
    %844 = vmatprep.subr.mxu0 0.0
    %845 = vmatpush1.msra.mxu0 0.0
    %846 = vmatprep.subr.mxu0 0.0
    %847 = vmatpush1.msra.mxu0 0.0
    %848 = vmatprep.subr.mxu0 0.0
    %849 = vmatpush1.msra.mxu0 0.0
    %850 = vmatprep.subr.mxu0 0.0
    %851 = vmatpush1.msra.mxu0 0.0
    %852 = vmatprep.mubr.f32.mxu0 0.0
    %853 = vmatmul.mubr.f32.gmra.mrb[0].mxu0 %v783
    %v854 = vpop.f32.mrb[0].mxu0
    %v855 = vadd.f32 %v234, %v854
    %v856 = vpop.f32.mrb[0].mxu0
    %857 = vdwg.mxu0
    %v858 = vadd.f32 %v787, %v855
    %v859 = vmul.f32 %v858, 0.5
    %v860 = vtanh.pop %v859
    %v861 = vadd.f32 %v860, 1.0
    %v862 = vmul.f32 %v861, 0.5
    %863 = vrot.lane.b32.xlu0 %v862, 64
    %v864 = vpop.permute.xlu0 %863
    %v865 = vmul.f32 %v864, %v855
    %v866 = vadd.f32 %v787, %v865
    %v867 = vtanh.pop %v866
    %868 = vrot.lane.b32.xlu0 %v867, 64
    %v869 = vpop.permute.xlu0 %868
    %870 = vrot.lane.b32.xlu0 %v862, 96
    %v871 = vpop.permute.xlu0 %870
    %v872 = vsub.f32 1.0, %v871
    %v873 = vmul.f32 %v872, %v869
    %v874 = vmul.f32 %v871, %v783
    %v875 = vadd.f32 %v873, %v874
    %s876 = scalar_lea.vmem [#allocation3], 48
    %877 = vst [vmem:[%s876] sm:$0xff] %v875
    %s878 = scalar_lea.vmem [#allocation2], 56
    %v879 = vld [vmem:[%s878] sm:$0xff]
    %880 = vmatprep.subr.mxu0 0.0
    %881 = vmatpush1.msra.mxu0 %v218
    %882 = vmatprep.subr.mxu0 0.0
    %883 = vmatpush1.msra.mxu0 %v219
    %884 = vmatprep.subr.mxu0 0.0
    %885 = vmatpush1.msra.mxu0 %v220
    %886 = vmatprep.subr.mxu0 0.0
    %887 = vmatpush1.msra.mxu0 %v221
    %888 = vmatprep.subr.mxu0 0.0
    %889 = vmatpush1.msra.mxu0 %v222
    %890 = vmatprep.subr.mxu0 0.0
    %891 = vmatpush1.msra.mxu0 %v223
    %892 = vmatprep.subr.mxu0 0.0
    %893 = vmatpush1.msra.mxu0 %v224
    %894 = vmatprep.subr.mxu0 0.0
    %895 = vmatpush1.msra.mxu0 %v225
    %896 = vmatprep.subr.mxu0 0.0
    %897 = vmatpush1.msra.mxu0 %v226
    %898 = vmatprep.subr.mxu0 0.0
    %899 = vmatpush1.msra.mxu0 %v227
    %900 = vmatprep.subr.mxu0 0.0
    %901 = vmatpush1.msra.mxu0 %v228
    %902 = vmatprep.subr.mxu0 0.0
    %903 = vmatpush1.msra.mxu0 %v229
    %904 = vmatprep.subr.mxu0 0.0
    %905 = vmatpush1.msra.mxu0 %v230
    %906 = vmatprep.subr.mxu0 0.0
    %907 = vmatpush1.msra.mxu0 %v231
    %908 = vmatprep.subr.mxu0 0.0
    %909 = vmatpush1.msra.mxu0 %v232
    %910 = vmatprep.subr.mxu0 0.0
    %911 = vmatpush1.msra.mxu0 %v233
    %912 = vmatprep.subr.mxu0 0.0
    %913 = vmatpush1.msra.mxu0 0.0
    %914 = vmatprep.subr.mxu0 0.0
    %915 = vmatpush1.msra.mxu0 0.0
    %916 = vmatprep.subr.mxu0 0.0
    %917 = vmatpush1.msra.mxu0 0.0
    %918 = vmatprep.subr.mxu0 0.0
    %919 = vmatpush1.msra.mxu0 0.0
    %920 = vmatprep.subr.mxu0 0.0
    %921 = vmatpush1.msra.mxu0 0.0
    %922 = vmatprep.subr.mxu0 0.0
    %923 = vmatpush1.msra.mxu0 0.0
    %924 = vmatprep.subr.mxu0 0.0
    %925 = vmatpush1.msra.mxu0 0.0
    %926 = vmatprep.subr.mxu0 0.0
    %927 = vmatpush1.msra.mxu0 0.0
    %928 = vmatprep.subr.mxu0 0.0
    %929 = vmatpush1.msra.mxu0 0.0
    %930 = vmatprep.subr.mxu0 0.0
    %931 = vmatpush1.msra.mxu0 0.0
    %932 = vmatprep.subr.mxu0 0.0
    %933 = vmatpush1.msra.mxu0 0.0
    %934 = vmatprep.subr.mxu0 0.0
    %935 = vmatpush1.msra.mxu0 0.0
    %936 = vmatprep.subr.mxu0 0.0
    %937 = vmatpush1.msra.mxu0 0.0
    %938 = vmatprep.subr.mxu0 0.0
    %939 = vmatpush1.msra.mxu0 0.0
    %940 = vmatprep.subr.mxu0 0.0
    %941 = vmatpush1.msra.mxu0 0.0
    %942 = vmatprep.subr.mxu0 0.0
    %943 = vmatpush1.msra.mxu0 0.0
    %944 = vmatprep.mubr.f32.mxu0 0.0
    %945 = vmatmul.mubr.f32.gmra.mrb[0].mxu0 %v875
    %v946 = vpop.f32.mrb[0].mxu0
    %v947 = vadd.f32 %v234, %v946
    %v948 = vpop.f32.mrb[0].mxu0
    %949 = vdwg.mxu0
    %v950 = vadd.f32 %v879, %v947
    %v951 = vmul.f32 %v950, 0.5
    %v952 = vtanh.pop %v951
    %v953 = vadd.f32 %v952, 1.0
    %v954 = vmul.f32 %v953, 0.5
    %955 = vrot.lane.b32.xlu0 %v954, 64
    %v956 = vpop.permute.xlu0 %955
    %v957 = vmul.f32 %v956, %v947
    %v958 = vadd.f32 %v879, %v957
    %v959 = vtanh.pop %v958
    %960 = vrot.lane.b32.xlu0 %v959, 64
    %v961 = vpop.permute.xlu0 %960
    %962 = vrot.lane.b32.xlu0 %v954, 96
    %v963 = vpop.permute.xlu0 %962
    %v964 = vsub.f32 1.0, %v963
    %v965 = vmul.f32 %v964, %v961
    %v966 = vmul.f32 %v963, %v875
    %v967 = vadd.f32 %v965, %v966
    %s968 = scalar_lea.vmem [#allocation3], 56
    %969 = vst [vmem:[%s968] sm:$0xff] %v967
    %970 = vst [vmem:[#allocation4] sm:$0xff] %v967
    %v971 = vld [vmem:[#allocation3] sm:$0xff]
    %v972 = vld [vmem:[#allocation3 + $0x8] sm:$0xff]
    %v973 = vld [vmem:[#allocation3 + $0x10] sm:$0xff]
    %v974 = vld [vmem:[#allocation3 + $0x18] sm:$0xff]
    %v975 = vld [vmem:[#allocation3 + $0x20] sm:$0xff]
    %v976 = vld [vmem:[#allocation3 + $0x28] sm:$0xff]
    %v977 = vld [vmem:[#allocation3 + $0x30] sm:$0xff]
    %v978 = vld [vmem:[#allocation3 + $0x38] sm:$0xff]
    %v979 = vld [vmem:[#allocation8] sm:$0xff]
    %v980 = vld [vmem:[#allocation8 + $0x8] sm:$0xff]
    %v981 = vld [vmem:[#allocation8 + $0x10] sm:$0xff]
    %v982 = vld [vmem:[#allocation8 + $0x18] sm:$0xff]
    %v983 = vld [vmem:[#allocation8 + $0x20] sm:$0xff]
    %v984 = vld [vmem:[#allocation8 + $0x28] sm:$0xff]
    %v985 = vld [vmem:[#allocation8 + $0x30] sm:$0xff]
    %v986 = vld [vmem:[#allocation8 + $0x38] sm:$0xff]
    %v987 = vld [vmem:[#allocation8 + $0x40] sm:$0xff]
    %v988 = vld [vmem:[#allocation8 + $0x48] sm:$0xff]
    %v989 = vld [vmem:[#allocation8 + $0x50] sm:$0xff]
    %v990 = vld [vmem:[#allocation8 + $0x58] sm:$0xff]
    %v991 = vld [vmem:[#allocation8 + $0x60] sm:$0xff]
    %v992 = vld [vmem:[#allocation8 + $0x68] sm:$0xff]
    %v993 = vld [vmem:[#allocation8 + $0x70] sm:$0xff]
    %v994 = vld [vmem:[#allocation8 + $0x78] sm:$0xff]
    %v995 = vld [vmem:[%s6] sm:$0x1]
    %v997 = vlaneseq
    %v998 = vshrl.u32 %v997, 7
    %v999 = vsub.s32 0, %v998
    %v1000 = vrot.slane %v995, %v999
    %1002 = vmatprep.subr.mxu0 0.0
    %1003 = vmatpush1.msra.mxu0 %v979
    %1004 = vmatprep.subr.mxu0 0.0
    %1005 = vmatpush1.msra.mxu0 %v980
    %1006 = vmatprep.subr.mxu0 0.0
    %1007 = vmatpush1.msra.mxu0 %v981
    %1008 = vmatprep.subr.mxu0 0.0
    %1009 = vmatpush1.msra.mxu0 %v982
    %1010 = vmatprep.subr.mxu0 0.0
    %1011 = vmatpush1.msra.mxu0 %v983
    %1012 = vmatprep.subr.mxu0 0.0
    %1013 = vmatpush1.msra.mxu0 %v984
    %1014 = vmatprep.subr.mxu0 0.0
    %1015 = vmatpush1.msra.mxu0 %v985
    %1016 = vmatprep.subr.mxu0 0.0
    %1017 = vmatpush1.msra.mxu0 %v986
    %1018 = vmatprep.subr.mxu0 0.0
    %1019 = vmatpush1.msra.mxu0 %v987
    %1020 = vmatprep.subr.mxu0 0.0
    %1021 = vmatpush1.msra.mxu0 %v988
    %1022 = vmatprep.subr.mxu0 0.0
    %1023 = vmatpush1.msra.mxu0 %v989
    %1024 = vmatprep.subr.mxu0 0.0
    %1025 = vmatpush1.msra.mxu0 %v990
    %1026 = vmatprep.subr.mxu0 0.0
    %1027 = vmatpush1.msra.mxu0 %v991
    %1028 = vmatprep.subr.mxu0 0.0
    %1029 = vmatpush1.msra.mxu0 %v992
    %1030 = vmatprep.subr.mxu0 0.0
    %1031 = vmatpush1.msra.mxu0 %v993
    %1032 = vmatprep.subr.mxu0 0.0
    %1033 = vmatpush1.msra.mxu0 %v994
    %1034 = vmatprep.subr.mxu0 0.0
    %1035 = vmatpush1.msra.mxu0 0.0
    %1036 = vmatprep.subr.mxu0 0.0
    %1037 = vmatpush1.msra.mxu0 0.0
    %1038 = vmatprep.subr.mxu0 0.0
    %1039 = vmatpush1.msra.mxu0 0.0
    %1040 = vmatprep.subr.mxu0 0.0
    %1041 = vmatpush1.msra.mxu0 0.0
    %1042 = vmatprep.subr.mxu0 0.0
    %1043 = vmatpush1.msra.mxu0 0.0
    %1044 = vmatprep.subr.mxu0 0.0
    %1045 = vmatpush1.msra.mxu0 0.0
    %1046 = vmatprep.subr.mxu0 0.0
    %1047 = vmatpush1.msra.mxu0 0.0
    %1048 = vmatprep.subr.mxu0 0.0
    %1049 = vmatpush1.msra.mxu0 0.0
    %1050 = vmatprep.subr.mxu0 0.0
    %1051 = vmatpush1.msra.mxu0 0.0
    %1052 = vmatprep.subr.mxu0 0.0
    %1053 = vmatpush1.msra.mxu0 0.0
    %1054 = vmatprep.subr.mxu0 0.0
    %1055 = vmatpush1.msra.mxu0 0.0
    %1056 = vmatprep.subr.mxu0 0.0
    %1057 = vmatpush1.msra.mxu0 0.0
    %1058 = vmatprep.subr.mxu0 0.0
    %1059 = vmatpush1.msra.mxu0 0.0
    %1060 = vmatprep.subr.mxu0 0.0
    %1061 = vmatpush1.msra.mxu0 0.0
    %1062 = vmatprep.subr.mxu0 0.0
    %1063 = vmatpush1.msra.mxu0 0.0
    %1064 = vmatprep.subr.mxu0 0.0
    %1065 = vmatpush1.msra.mxu0 0.0
    %1066 = vmatprep.mubr.f32.mxu0 0.0
    %1067 = vmatmul.mubr.f32.gmra.mrb[0].mxu0 %v971
    %v1068 = vpop.f32.mrb[0].mxu0
    %v1069 = vadd.f32 %v1000, %v1068
    %v1070 = vpop.f32.mrb[0].mxu0
    %1071 = vmatprep.mubr.f32.mxu0 0.0
    %1072 = vmatmul.mubr.f32.gmra.mrb[0].mxu0 %v972
    %v1073 = vpop.f32.mrb[0].mxu0
    %v1074 = vadd.f32 %v1000, %v1073
    %v1075 = vpop.f32.mrb[0].mxu0
    %1076 = vmatprep.mubr.f32.mxu0 0.0
    %1077 = vmatmul.mubr.f32.gmra.mrb[0].mxu0 %v973
    %v1078 = vpop.f32.mrb[0].mxu0
    %v1079 = vadd.f32 %v1000, %v1078
    %v1080 = vpop.f32.mrb[0].mxu0
    %1081 = vmatprep.mubr.f32.mxu0 0.0
    %1082 = vmatmul.mubr.f32.gmra.mrb[0].mxu0 %v974
    %v1083 = vpop.f32.mrb[0].mxu0
    %v1084 = vadd.f32 %v1000, %v1083
    %v1085 = vpop.f32.mrb[0].mxu0
    %1086 = vmatprep.mubr.f32.mxu0 0.0
    %1087 = vmatmul.mubr.f32.gmra.mrb[0].mxu0 %v975
    %v1088 = vpop.f32.mrb[0].mxu0
    %v1089 = vadd.f32 %v1000, %v1088
    %v1090 = vpop.f32.mrb[0].mxu0
    %1091 = vmatprep.mubr.f32.mxu0 0.0
    %1092 = vmatmul.mubr.f32.gmra.mrb[0].mxu0 %v976
    %v1093 = vpop.f32.mrb[0].mxu0
    %v1094 = vadd.f32 %v1000, %v1093
    %v1095 = vpop.f32.mrb[0].mxu0
    %1096 = vmatprep.mubr.f32.mxu0 0.0
    %1097 = vmatmul.mubr.f32.gmra.mrb[0].mxu0 %v977
    %v1098 = vpop.f32.mrb[0].mxu0
    %v1099 = vadd.f32 %v1000, %v1098
    %v1100 = vpop.f32.mrb[0].mxu0
    %1101 = vmatprep.mubr.f32.mxu0 0.0
    %1102 = vmatmul.mubr.f32.gmra.mrb[0].mxu0 %v978
    %v1103 = vpop.f32.mrb[0].mxu0
    %v1104 = vadd.f32 %v1000, %v1103
    %v1105 = vpop.f32.mrb[0].mxu0
    %1106 = vdwg.mxu0
    %1107 = vst [vmem:[#allocation10] sm:$0xff] %v1069
    %1108 = vst [vmem:[#allocation10 + $0x8] sm:$0xff] %v1074
    %1109 = vst [vmem:[#allocation10 + $0x10] sm:$0xff] %v1079
    %1110 = vst [vmem:[#allocation10 + $0x18] sm:$0xff] %v1084
    %1111 = vst [vmem:[#allocation10 + $0x20] sm:$0xff] %v1089
    %1112 = vst [vmem:[#allocation10 + $0x28] sm:$0xff] %v1094
    %1113 = vst [vmem:[#allocation10 + $0x30] sm:$0xff] %v1099
    %1114 = vst [vmem:[#allocation10 + $0x38] sm:$0xff] %v1104
    // Predicated region
    $region42: #{tpu_custom_call.1} parent=1 // pred_check
      _
    $region43: #{tpu_custom_call.1} parent=1 // pred_check_branch
      %1116 = sbr.rel (0) target = $region45
    $region44: #{tpu_custom_call.1} parent=1 // pred_region
      %s1118 = ssub.s32 1024, 1024
      %1119 = vsyncadd [#allocation7], %s1118
      %s1120 = sshll.u32 [#allocation10], 4
      %s1121 = int_to_ptr.vmem [resolvable:$true] %s1120
      %1126 = dma.vmem_to_hbm [thread:$0]  %s1121, 1024, %s7, [#allocation7], 128, 128, 8
    $region45: #{tpu_custom_call.1} parent=1 // pred_fallthru
      _
    // Predicated region
    $region46: #{tpu_custom_call.1} parent=1 // pred_check
      _
    $region47: #{tpu_custom_call.1} parent=1 // pred_check_branch
      %1128 = sbr.rel (0) target = $region49
    $region48: #{tpu_custom_call.1} parent=1 // pred_region
      %1129 = dma.done [#allocation7], 1024
    $region49: #{tpu_custom_call.1} parent=1 // pred_fallthru
      _
    %1130 = vsyncpa [#allocation6], 1
    %1131 = vsyncpa [#allocation9], 1
    %1132 = vsyncpa [#allocation7], 1

</llo_original>
